<compile_context>
chip_gen: v7x
topology: tpu7x:2x2x1
jax: 0.10.0
libtpu: 0.0.40
codegen_flags: <defaults>
</compile_context>

<pallas_src>
import functools
import math

import jax
import jax.numpy as jnp
from jax.experimental import pallas as pl
from jax.experimental.pallas import tpu as pltpu


# ---------------------------------------------------------------------------
# VMEM budget (per-generation)
# ---------------------------------------------------------------------------

@functools.lru_cache(maxsize=None)
def _vmem_limit_bytes():
    try:
        cap = int(pltpu.get_tpu_info().vmem_capacity_bytes)
    except Exception:
        cap = 64 * 1024 * 1024  # conservative fallback, safe on every generation
    # ~3/4 of physical VMEM, capped at 100 MiB (v5e/v6e: ~96 MiB, v7x: 48 MiB).
    return min((cap * 3) // 4, 100 * 1024 * 1024)


# ---------------------------------------------------------------------------
# Pallas kernels
# ---------------------------------------------------------------------------

def _attn_block_kernel(x_ref, bias_ref, wq_ref, bq_ref, wkv_ref, bkv_ref,
                       wo_ref, bo_ref, g_ref, b_ref, o_ref, kv_ref,
                       *, n_heads, tq):
    """Fused self-attention block. Grid = (batch, query_tiles).

    x:    [1, S, E]  bf16      bias: [1, 1, S] f32 (0 = attend, -1e10 = masked)
    wq:   [E, E]   bf16 (1/sqrt(dh) folded in)   bq:  [1, E]  f32 (scaled)
    wkv:  [E, 2E]  bf16                          bkv: [1, 2E] f32
    wo:   [E, E]   bf16                          bo:  [1, E]  f32
    g,b:  [1, E]   f32 (LayerNorm affine)
    out:  [1, tq, E] bf16  = LayerNorm(x + fc_o(attention(x)))
    kv_ref: VMEM scratch [S, 2E] bf16 — K/V projections, computed once per batch.
    """
    qi = pl.program_id(1)
    E = x_ref.shape[-1]
    dh = E // n_heads

    # K/V projection for the whole sequence, once per batch element (qi == 0),
    # reused by every query tile of that batch element.
    @pl.when(qi == 0)
    def _():
        xkv = x_ref[0]                                             # [S, E] bf16
        kv = jnp.dot(xkv, wkv_ref[...],
                     preferred_element_type=jnp.float32) + bkv_ref[...]
        kv_ref[...] = kv.astype(jnp.bfloat16)                      # [S, 2E]

    # Query tile of the input (also used for the residual).
    q_start = pl.multiple_of(qi * tq, tq)
    xq = x_ref[0, pl.ds(q_start, tq), :]                           # [tq, E] bf16
    x32 = xq.astype(jnp.float32)

    # Q projection (scale already folded into wq/bq).
    q = (jnp.dot(xq, wq_ref[...], preferred_element_type=jnp.float32)
         + bq_ref[...]).astype(jnp.bfloat16)                       # [tq, E]

    bias = bias_ref[0]                                             # [1, S] additive mask

    # Per-head attention with per-head accumulation of the output projection.
    sa = jnp.zeros((tq, E), jnp.float32)
    for h in range(n_heads):                                       # static head loop
        lo = h * dh
        qh = q[:, lo:lo + dh]                                      # [tq, dh] bf16
        kh = kv_ref[:, lo:lo + dh]                                 # [S, dh]  bf16
        vh = kv_ref[:, E + lo:E + lo + dh]                         # [S, dh]  bf16
        # q @ k.T without materializing a transpose
        e = jax.lax.dot_general(qh, kh, (((1,), (1,)), ((), ())),
                                preferred_element_type=jnp.float32)   # [tq, S]
        e = e + bias                                               # masked_fill as add
        m = jnp.max(e, axis=-1, keepdims=True)
        p = jnp.exp(e - m)
        p = p * pl.reciprocal(jnp.sum(p, axis=-1, keepdims=True), approx=True)
        ctx = jnp.dot(p.astype(jnp.bfloat16), vh,
                      preferred_element_type=jnp.float32)          # [tq, dh]
        sa = sa + jnp.dot(ctx.astype(jnp.bfloat16), wo_ref[lo:lo + dh, :],
                          preferred_element_type=jnp.float32)      # [tq, E]

    # residual + LayerNorm (f32 statistics, eps = 1e-5 like torch)
    z = x32 + sa + bo_ref[...]
    mu = jnp.mean(z, axis=-1, keepdims=True)
    var = jnp.mean((z - mu) ** 2, axis=-1, keepdims=True)
    out = (z - mu) * jax.lax.rsqrt(var + 1e-5) * g_ref[...] + b_ref[...]
    o_ref[0] = out.astype(o_ref.dtype)


def _ffn_block_kernel(x_ref, w1_ref, b1_ref, w2_ref, b2_ref, g_ref, b_ref,
                      o_ref, acc_ref):
    """Fused position-wise FFN block. Grid = (row_tiles, pf_tiles).

    x:  [tm, E] bf16   w1: [E, tk] bf16   b1: [1, tk] f32
                       w2: [tk, E] bf16   b2: [1, E]  f32
    acc_ref: VMEM f32 [tm, E] accumulator over the pf (reduction) axis.
    out = LayerNorm(x + fc2(relu(fc1(x))))   (bf16)
    """
    k = pl.program_id(1)

    @pl.when(k == 0)
    def _():
        acc_ref[...] = jnp.zeros_like(acc_ref)

    x = x_ref[...]                                                  # [tm, E] bf16
    h = jnp.dot(x, w1_ref[...],
                preferred_element_type=jnp.float32) + b1_ref[...]   # [tm, tk]
    h = jnp.maximum(h, 0.0)
    acc_ref[...] += jnp.dot(h.astype(jnp.bfloat16), w2_ref[...],
                            preferred_element_type=jnp.float32)     # [tm, E]

    @pl.when(k == pl.num_programs(1) - 1)
    def _():
        z = x.astype(jnp.float32) + acc_ref[...] + b2_ref[...]
        mu = jnp.mean(z, axis=-1, keepdims=True)
        var = jnp.mean((z - mu) ** 2, axis=-1, keepdims=True)
        o_ref[...] = ((z - mu) * jax.lax.rsqrt(var + 1e-5)
                      * g_ref[...] + b_ref[...]).astype(o_ref.dtype)


# ---------------------------------------------------------------------------
# Tiling helpers & wrappers
# ---------------------------------------------------------------------------

def _q_tile(S):
    # Prefer 256 (fills the 256-wide v6e/v7x MXU), then 128 (v5e), etc.
    for t in (256, 128, 64, 32, 16, 8):
        if S % t == 0:
            return t
    return S  # full-extent block is always legal


def _row_tile(N):
    # Largest aligned tile that still leaves >= 4 grid steps (pipelining / megacore);
    # otherwise the largest tile that divides N.
    cands = (512, 256, 128, 64, 32, 16, 8)
    for t in cands:
        if N % t == 0 and N // t >= 4:
            return t
    for t in cands:
        if N % t == 0:
            return t
    return N


def _pf_tile(pf):
    # Bound FFN weight residency (important on v7x's 64 MiB VMEM).
    for t in (2048, 1024, 512, 256, 128):
        if pf % t == 0:
            return t
    return pf


def attn_block(x, bias, wq, bq, wkv, bkv, wo, bo, g, b, n_heads):
    B, S, E = x.shape
    tq = _q_tile(S)
    kernel = functools.partial(_attn_block_kernel, n_heads=n_heads, tq=tq)
    return pl.pallas_call(
        kernel,
        out_shape=jax.ShapeDtypeStruct((B, S, E), jnp.bfloat16),
        grid=(B, S // tq),
        in_specs=[
            pl.BlockSpec((1, S, E), lambda i, j: (i, 0, 0)),       # x (full sequence)
            pl.BlockSpec((1, 1, S), lambda i, j: (i, 0, 0)),       # additive mask bias
            pl.BlockSpec((E, E), lambda i, j: (0, 0)),             # wq (scaled)
            pl.BlockSpec((1, E), lambda i, j: (0, 0)),             # bq (scaled)
            pl.BlockSpec((E, 2 * E), lambda i, j: (0, 0)),         # wkv
            pl.BlockSpec((1, 2 * E), lambda i, j: (0, 0)),         # bkv
            pl.BlockSpec((E, E), lambda i, j: (0, 0)),             # wo
            pl.BlockSpec((1, E), lambda i, j: (0, 0)),             # bo
            pl.BlockSpec((1, E), lambda i, j: (0, 0)),             # ln gamma
            pl.BlockSpec((1, E), lambda i, j: (0, 0)),             # ln beta
        ],
        out_specs=pl.BlockSpec((1, tq, E), lambda i, j: (i, j, 0)),
        scratch_shapes=[pltpu.VMEM((S, 2 * E), jnp.bfloat16)],
        compiler_params=pltpu.CompilerParams(
            dimension_semantics=("parallel", "arbitrary"),
            vmem_limit_bytes=_vmem_limit_bytes()),
    )(x, bias, wq, bq, wkv, bkv, wo, bo, g, b)


def ffn_block(x2d, w1, b1, w2, b2, g, b):
    N, E = x2d.shape
    pf = w1.shape[1]
    tm = _row_tile(N)
    tk = _pf_tile(pf)
    return pl.pallas_call(
        _ffn_block_kernel,
        out_shape=jax.ShapeDtypeStruct((N, E), jnp.bfloat16),
        grid=(N // tm, pf // tk),
        in_specs=[
            pl.BlockSpec((tm, E), lambda i, k: (i, 0)),
            pl.BlockSpec((E, tk), lambda i, k: (0, k)),
            pl.BlockSpec((1, tk), lambda i, k: (0, k)),
            pl.BlockSpec((tk, E), lambda i, k: (k, 0)),
            pl.BlockSpec((1, E), lambda i, k: (0, 0)),
            pl.BlockSpec((1, E), lambda i, k: (0, 0)),
            pl.BlockSpec((1, E), lambda i, k: (0, 0)),
        ],
        out_specs=pl.BlockSpec((tm, E), lambda i, k: (i, 0)),
        scratch_shapes=[pltpu.VMEM((tm, E), jnp.float32)],
        compiler_params=pltpu.CompilerParams(
            dimension_semantics=("parallel", "arbitrary"),
            vmem_limit_bytes=_vmem_limit_bytes()),
    )(x2d, w1, b1, w2, b2, g, b)


# ---------------------------------------------------------------------------
# Parameter init (deterministic, synthetic) and forward pass
# ---------------------------------------------------------------------------

def init_encoder_params(key, hid_dim, n_layers, n_heads, pf_dim, max_length):
    def nrm(k, shape):
        return 0.02 * jax.random.normal(k, shape, jnp.float32)

    dh = hid_dim // n_heads
    inv_scale = 1.0 / math.sqrt(dh)

    keys = jax.random.split(key, n_layers)
    layers = []
    for li in range(n_layers):
        ks = jax.random.split(keys[li], 12)
        # torch Linear weights are [out, in]; pre-transpose once, cast to bf16,
        # fold 1/sqrt(head_dim) into the Q projection, fuse K/V.
        wq = nrm(ks[0], (hid_dim, hid_dim))
        wk = nrm(ks[1], (hid_dim, hid_dim))
        wv = nrm(ks[2], (hid_dim, hid_dim))
        wo = nrm(ks[3], (hid_dim, hid_dim))
        w1 = nrm(ks[4], (pf_dim, hid_dim))
        w2 = nrm(ks[5], (hid_dim, pf_dim))
        bq = nrm(ks[6], (hid_dim,))
        bk = nrm(ks[7], (hid_dim,))
        bv = nrm(ks[8], (hid_dim,))
        bo = nrm(ks[9], (hid_dim,))
        b1 = nrm(ks[10], (pf_dim,))
        b2 = nrm(ks[11], (hid_dim,))
        lp = dict(
            wq=(wq.T * inv_scale).astype(jnp.bfloat16),                          # [E,E]
            bq=(bq * inv_scale)[None, :],                                        # [1,E]
            wkv=jnp.concatenate([wk.T, wv.T], axis=1).astype(jnp.bfloat16),      # [E,2E]
            bkv=jnp.concatenate([bk, bv])[None, :],                              # [1,2E]
            wo=wo.T.astype(jnp.bfloat16),                                        # [E,E]
            bo=bo[None, :],
            w1=w1.T.astype(jnp.bfloat16),                                        # [E,pf]
            b1=b1[None, :],
            w2=w2.T.astype(jnp.bfloat16),                                        # [pf,E]
            b2=b2[None, :],
            ln1_g=jnp.ones((1, hid_dim), jnp.float32),
            ln1_b=jnp.zeros((1, hid_dim), jnp.float32),
            ln2_g=jnp.ones((1, hid_dim), jnp.float32),
            ln2_b=jnp.zeros((1, hid_dim), jnp.float32),
        )
        layers.append(lp)

    # sinusoidal positional encoding buffer, shape [1, max_length, hid_dim]
    position = jnp.arange(max_length, dtype=jnp.float32)[:, None]
    div_term = jnp.exp(jnp.arange(0, hid_dim, 2, dtype=jnp.float32)
                       * (-math.log(10000.0) / hid_dim))
    pe = jnp.zeros((1, max_length, hid_dim), jnp.float32)
    pe = pe.at[0, :, 0::2].set(jnp.sin(position * div_term))
    pe = pe.at[0, :, 1::2].set(jnp.cos(position * div_term))

    return dict(layers=layers, pe=pe, hid_dim=hid_dim, n_heads=n_heads)


def encoder_forward(params, src, src_mask):
    """src: [B, S, hid_dim]; src_mask: [B, 1, 1, S] (nonzero = attend)."""
    B, S, E = src.shape
    H = params["n_heads"]

    # src * sqrt(hid_dim) + positional encoding (dropout = identity in eval mode).
    # Plain jnp (tiny elementwise op, XLA fuses it). Inter-kernel activations are bf16.
    # (Original module broadcasts pe over the full buffer, i.e. assumes S == max_length.)
    x = (src * math.sqrt(E) + params["pe"][:, :S, :]).astype(jnp.bfloat16)

    # Additive mask bias [B, 1, S]: 0 where attend, -1e10 where masked.
    bias = jnp.where(src_mask.reshape(B, 1, S) == 0, -1e10, 0.0).astype(jnp.float32)

    for lp in params["layers"]:
        x = attn_block(x, bias, lp["wq"], lp["bq"], lp["wkv"], lp["bkv"],
                       lp["wo"], lp["bo"], lp["ln1_g"], lp["ln1_b"], H)
        x2 = ffn_block(x.reshape(B * S, E), lp["w1"], lp["b1"], lp["w2"], lp["b2"],
                       lp["ln2_g"], lp["ln2_b"])
        x = x2.reshape(B, S, E)
    return x.astype(jnp.float32)


# ---------------------------------------------------------------------------
# Demo
# ---------------------------------------------------------------------------

if __name__ == "__main__":
    B, S = 2, 8
    hid_dim, n_heads, pf_dim, n_layers = 32, 4, 64, 2
    max_length = S  # pe broadcast (as in the PyTorch module) requires seq_len == max_length

    root = jax.random.PRNGKey(0)
    kp, ks = jax.random.split(root, 2)

    params = init_encoder_params(kp, hid_dim, n_layers, n_heads, pf_dim, max_length)
    src = jax.random.normal(ks, (B, S, hid_dim), jnp.float32)

    # src_mask: [B, 1, 1, S], nonzero = attend, 0 = padded/ignored
    keep = jnp.ones((B, S), jnp.float32)
    keep = keep.at[1, S - 2:].set(0.0)   # pad last 2 positions of batch element 1
    src_mask = keep[:, None, None, :]

    out = encoder_forward(params, src, src_mask)
    jax.block_until_ready(out)

    assert out.shape == (B, S, hid_dim)
    assert bool(jnp.all(jnp.isfinite(out)))
    print("KERNEL_OK")
</pallas_src>

<mosaic_0001>
module attributes {stable_mosaic.version = 11 : i64} {
  func.func @_attn_block_kernel(%arg0: i32, %arg1: i32, %arg2: memref<1x8x32xbf16, #tpu.memory_space<vmem>>, %arg3: memref<1x1x8xf32, #tpu.memory_space<vmem>>, %arg4: memref<32x32xbf16, #tpu.memory_space<vmem>>, %arg5: memref<1x32xf32, #tpu.memory_space<vmem>>, %arg6: memref<32x64xbf16, #tpu.memory_space<vmem>>, %arg7: memref<1x64xf32, #tpu.memory_space<vmem>>, %arg8: memref<32x32xbf16, #tpu.memory_space<vmem>>, %arg9: memref<1x32xf32, #tpu.memory_space<vmem>>, %arg10: memref<1x32xf32, #tpu.memory_space<vmem>>, %arg11: memref<1x32xf32, #tpu.memory_space<vmem>>, %arg12: memref<1x8x32xbf16, #tpu.memory_space<vmem>>, %arg13: memref<8x64xbf16, #tpu.memory_space<vmem>>) attributes {dimension_semantics = [#tpu.dimension_semantics<parallel>, #tpu.dimension_semantics<arbitrary>], iteration_bounds = array<i64: 2, 1>, scalar_prefetch = 0 : i64, scratch_operands = 1 : i64, tpu.core_type = #tpu.core_type<tc>, window_params = [{transform_indices = @transform_0, window_bounds = array<i64: 1, 8, 32>}, {transform_indices = @transform_1, window_bounds = array<i64: 1, 1, 8>}, {pipeline_mode = #tpu.pipeline_mode<synchronous>, transform_indices = @transform_2, window_bounds = array<i64: 32, 32>}, {pipeline_mode = #tpu.pipeline_mode<synchronous>, transform_indices = @transform_3, window_bounds = array<i64: 1, 32>}, {pipeline_mode = #tpu.pipeline_mode<synchronous>, transform_indices = @transform_4, window_bounds = array<i64: 32, 64>}, {pipeline_mode = #tpu.pipeline_mode<synchronous>, transform_indices = @transform_5, window_bounds = array<i64: 1, 64>}, {pipeline_mode = #tpu.pipeline_mode<synchronous>, transform_indices = @transform_6, window_bounds = array<i64: 32, 32>}, {pipeline_mode = #tpu.pipeline_mode<synchronous>, transform_indices = @transform_7, window_bounds = array<i64: 1, 32>}, {pipeline_mode = #tpu.pipeline_mode<synchronous>, transform_indices = @transform_8, window_bounds = array<i64: 1, 32>}, {pipeline_mode = #tpu.pipeline_mode<synchronous>, transform_indices = @transform_9, window_bounds = array<i64: 1, 32>}, {transform_indices = @transform_10, window_bounds = array<i64: 1, 8, 32>}]} {
    %c0_i32 = arith.constant 0 : i32
    %0 = arith.cmpi eq, %arg1, %c0_i32 : i32
    %1 = arith.extui %0 : i1 to i32
    %c0_i32_0 = arith.constant 0 : i32
    %2 = arith.cmpi ne, %1, %c0_i32_0 : i32
    scf.if %2 {
      %c0_61 = arith.constant 0 : index
      %c0_62 = arith.constant 0 : index
      %c0_63 = arith.constant 0 : index
      %138 = vector.load %arg2[%c0_61, %c0_62, %c0_63] : memref<1x8x32xbf16, #tpu.memory_space<vmem>>, vector<1x8x32xbf16>
      %139 = vector.shape_cast %138 : vector<1x8x32xbf16> to vector<8x32xbf16>
      %c0_64 = arith.constant 0 : index
      %c0_65 = arith.constant 0 : index
      %140 = vector.load %arg6[%c0_64, %c0_65] : memref<32x64xbf16, #tpu.memory_space<vmem>>, vector<32x64xbf16>
      %cst_66 = arith.constant dense<0.000000e+00> : vector<8x64xf32>
      %141 = tpu.matmul %139, %140, %cst_66 {dimension_numbers = #tpu.dot_dimension_numbers<[1], [0], [0], [1], [0, 0, 1, 1], [], []>} : vector<8x32xbf16>, vector<32x64xbf16>, vector<8x64xf32> -> vector<8x64xf32>
      %c0_67 = arith.constant 0 : index
      %c0_68 = arith.constant 0 : index
      %142 = vector.load %arg7[%c0_67, %c0_68] : memref<1x64xf32, #tpu.memory_space<vmem>>, vector<1x64xf32>
      %143 = vector.broadcast %142 : vector<1x64xf32> to vector<8x64xf32>
      %144 = arith.addf %141, %143 : vector<8x64xf32>
      %145 = arith.truncf %144 : vector<8x64xf32> to vector<8x64xbf16>
      %c0_69 = arith.constant 0 : index
      %c0_70 = arith.constant 0 : index
      %146 = vector.load %arg13[%c0_69, %c0_70] : memref<8x64xbf16, #tpu.memory_space<vmem>>, vector<8x64xbf16>
      tpu.vector_store %arg13[%c0_69, %c0_70], %145 {strides = array<i32>} : memref<8x64xbf16, #tpu.memory_space<vmem>>, vector<8x64xbf16>,
    } else {
    }
    %c8_i32 = arith.constant 8 : i32
    %3 = arith.muli %arg1, %c8_i32 : i32
    %4 = tpu.assume_multiple %3, 8 : i32
    %c0 = arith.constant 0 : index
    %5 = arith.index_cast %4 : i32 to index
    %c0_1 = arith.constant 0 : index
    %6 = vector.load %arg2[%c0, %5, %c0_1] : memref<1x8x32xbf16, #tpu.memory_space<vmem>>, vector<1x8x32xbf16>
    %7 = vector.shape_cast %6 : vector<1x8x32xbf16> to vector<8x32xbf16>
    %8 = arith.extf %7 : vector<8x32xbf16> to vector<8x32xf32>
    %c0_2 = arith.constant 0 : index
    %c0_3 = arith.constant 0 : index
    %9 = vector.load %arg4[%c0_2, %c0_3] : memref<32x32xbf16, #tpu.memory_space<vmem>>, vector<32x32xbf16>
    %cst = arith.constant dense<0.000000e+00> : vector<8x32xf32>
    %10 = tpu.matmul %7, %9, %cst {dimension_numbers = #tpu.dot_dimension_numbers<[1], [0], [0], [1], [0, 0, 1, 1], [], []>} : vector<8x32xbf16>, vector<32x32xbf16>, vector<8x32xf32> -> vector<8x32xf32>
    %c0_4 = arith.constant 0 : index
    %c0_5 = arith.constant 0 : index
    %11 = vector.load %arg5[%c0_4, %c0_5] : memref<1x32xf32, #tpu.memory_space<vmem>>, vector<1x32xf32>
    %12 = vector.broadcast %11 : vector<1x32xf32> to vector<8x32xf32>
    %13 = arith.addf %10, %12 : vector<8x32xf32>
    %14 = arith.truncf %13 : vector<8x32xf32> to vector<8x32xbf16>
    %c0_6 = arith.constant 0 : index
    %c0_7 = arith.constant 0 : index
    %c0_8 = arith.constant 0 : index
    %15 = vector.load %arg3[%c0_6, %c0_7, %c0_8] : memref<1x1x8xf32, #tpu.memory_space<vmem>>, vector<1x1x8xf32>
    %16 = vector.shape_cast %15 : vector<1x1x8xf32> to vector<1x8xf32>
    %cst_9 = arith.constant 0.000000e+00 : f32
    %17 = vector.broadcast %cst_9 : f32 to vector<8x32xf32>
    %18 = vector.extract_strided_slice %14 {offsets = [0, 0], sizes = [8, 8], strides = [1, 1]} : vector<8x32xbf16> to vector<8x8xbf16>
    %c0_10 = arith.constant 0 : index
    %c0_11 = arith.constant 0 : index
    %19 = vector.load %arg13[%c0_10, %c0_11] : memref<8x64xbf16, #tpu.memory_space<vmem>>, vector<8x8xbf16>
    %c0_12 = arith.constant 0 : index
    %c32 = arith.constant 32 : index
    %20 = vector.load %arg13[%c0_12, %c32] : memref<8x64xbf16, #tpu.memory_space<vmem>>, vector<8x8xbf16>
    %cst_13 = arith.constant dense<0.000000e+00> : vector<8x8xf32>
    %21 = tpu.matmul %18, %19, %cst_13 {dimension_numbers = #tpu.dot_dimension_numbers<[1], [1], [0], [0], [0, 0, 1, 0], [], []>} : vector<8x8xbf16>, vector<8x8xbf16>, vector<8x8xf32> -> vector<8x8xf32>
    %22 = vector.broadcast %16 : vector<1x8xf32> to vector<8x8xf32>
    %23 = arith.addf %21, %22 : vector<8x8xf32>
    %cst_14 = arith.constant dense<0xFF800000> : vector<8xf32>
    %24 = vector.multi_reduction <maximumf>, %23, %cst_14 [1] : vector<8x8xf32> to vector<8xf32>
    %25 = vector.shape_cast %24 : vector<8xf32> to vector<8x1xf32>
    %26 = vector.broadcast %25 : vector<8x1xf32> to vector<8x8xf32>
    %27 = arith.subf %23, %26 : vector<8x8xf32>
    %28 = math.exp %27 : vector<8x8xf32>
    %cst_15 = arith.constant dense<0.000000e+00> : vector<8xf32>
    %29 = vector.multi_reduction <add>, %28, %cst_15 [1] : vector<8x8xf32> to vector<8xf32>
    %30 = vector.shape_cast %29 : vector<8xf32> to vector<8x1xf32>
    %31 = tpu.reciprocal %30 {approx = true} : vector<8x1xf32> -> vector<8x1xf32>
    %32 = vector.broadcast %31 : vector<8x1xf32> to vector<8x8xf32>
    %33 = arith.mulf %28, %32 : vector<8x8xf32>
    %34 = arith.truncf %33 : vector<8x8xf32> to vector<8x8xbf16>
    %cst_16 = arith.constant dense<0.000000e+00> : vector<8x8xf32>
    %35 = tpu.matmul %34, %20, %cst_16 {dimension_numbers = #tpu.dot_dimension_numbers<[1], [0], [0], [1], [0, 0, 1, 1], [], []>} : vector<8x8xbf16>, vector<8x8xbf16>, vector<8x8xf32> -> vector<8x8xf32>
    %36 = arith.truncf %35 : vector<8x8xf32> to vector<8x8xbf16>
    %c0_17 = arith.constant 0 : index
    %c0_18 = arith.constant 0 : index
    %37 = vector.load %arg8[%c0_17, %c0_18] : memref<32x32xbf16, #tpu.memory_space<vmem>>, vector<8x32xbf16>
    %cst_19 = arith.constant dense<0.000000e+00> : vector<8x32xf32>
    %38 = tpu.matmul %36, %37, %cst_19 {dimension_numbers = #tpu.dot_dimension_numbers<[1], [0], [0], [1], [0, 0, 1, 1], [], []>} : vector<8x8xbf16>, vector<8x32xbf16>, vector<8x32xf32> -> vector<8x32xf32>
    %39 = arith.addf %17, %38 : vector<8x32xf32>
    %40 = vector.extract_strided_slice %14 {offsets = [0, 8], sizes = [8, 8], strides = [1, 1]} : vector<8x32xbf16> to vector<8x8xbf16>
    %c0_20 = arith.constant 0 : index
    %c8 = arith.constant 8 : index
    %41 = vector.load %arg13[%c0_20, %c8] : memref<8x64xbf16, #tpu.memory_space<vmem>>, vector<8x8xbf16>
    %c0_21 = arith.constant 0 : index
    %c40 = arith.constant 40 : index
    %42 = vector.load %arg13[%c0_21, %c40] : memref<8x64xbf16, #tpu.memory_space<vmem>>, vector<8x8xbf16>
    %cst_22 = arith.constant dense<0.000000e+00> : vector<8x8xf32>
    %43 = tpu.matmul %40, %41, %cst_22 {dimension_numbers = #tpu.dot_dimension_numbers<[1], [1], [0], [0], [0, 0, 1, 0], [], []>} : vector<8x8xbf16>, vector<8x8xbf16>, vector<8x8xf32> -> vector<8x8xf32>
    %44 = vector.broadcast %16 : vector<1x8xf32> to vector<8x8xf32>
    %45 = arith.addf %43, %44 : vector<8x8xf32>
    %cst_23 = arith.constant dense<0xFF800000> : vector<8xf32>
    %46 = vector.multi_reduction <maximumf>, %45, %cst_23 [1] : vector<8x8xf32> to vector<8xf32>
    %47 = vector.shape_cast %46 : vector<8xf32> to vector<8x1xf32>
    %48 = vector.broadcast %47 : vector<8x1xf32> to vector<8x8xf32>
    %49 = arith.subf %45, %48 : vector<8x8xf32>
    %50 = math.exp %49 : vector<8x8xf32>
    %cst_24 = arith.constant dense<0.000000e+00> : vector<8xf32>
    %51 = vector.multi_reduction <add>, %50, %cst_24 [1] : vector<8x8xf32> to vector<8xf32>
    %52 = vector.shape_cast %51 : vector<8xf32> to vector<8x1xf32>
    %53 = tpu.reciprocal %52 {approx = true} : vector<8x1xf32> -> vector<8x1xf32>
    %54 = vector.broadcast %53 : vector<8x1xf32> to vector<8x8xf32>
    %55 = arith.mulf %50, %54 : vector<8x8xf32>
    %56 = arith.truncf %55 : vector<8x8xf32> to vector<8x8xbf16>
    %cst_25 = arith.constant dense<0.000000e+00> : vector<8x8xf32>
    %57 = tpu.matmul %56, %42, %cst_25 {dimension_numbers = #tpu.dot_dimension_numbers<[1], [0], [0], [1], [0, 0, 1, 1], [], []>} : vector<8x8xbf16>, vector<8x8xbf16>, vector<8x8xf32> -> vector<8x8xf32>
    %58 = arith.truncf %57 : vector<8x8xf32> to vector<8x8xbf16>
    %c8_26 = arith.constant 8 : index
    %c0_27 = arith.constant 0 : index
    %59 = vector.load %arg8[%c8_26, %c0_27] : memref<32x32xbf16, #tpu.memory_space<vmem>>, vector<8x32xbf16>
    %cst_28 = arith.constant dense<0.000000e+00> : vector<8x32xf32>
    %60 = tpu.matmul %58, %59, %cst_28 {dimension_numbers = #tpu.dot_dimension_numbers<[1], [0], [0], [1], [0, 0, 1, 1], [], []>} : vector<8x8xbf16>, vector<8x32xbf16>, vector<8x32xf32> -> vector<8x32xf32>
    %61 = arith.addf %39, %60 : vector<8x32xf32>
    %62 = vector.extract_strided_slice %14 {offsets = [0, 16], sizes = [8, 8], strides = [1, 1]} : vector<8x32xbf16> to vector<8x8xbf16>
    %c0_29 = arith.constant 0 : index
    %c16 = arith.constant 16 : index
    %63 = vector.load %arg13[%c0_29, %c16] : memref<8x64xbf16, #tpu.memory_space<vmem>>, vector<8x8xbf16>
    %c0_30 = arith.constant 0 : index
    %c48 = arith.constant 48 : index
    %64 = vector.load %arg13[%c0_30, %c48] : memref<8x64xbf16, #tpu.memory_space<vmem>>, vector<8x8xbf16>
    %cst_31 = arith.constant dense<0.000000e+00> : vector<8x8xf32>
    %65 = tpu.matmul %62, %63, %cst_31 {dimension_numbers = #tpu.dot_dimension_numbers<[1], [1], [0], [0], [0, 0, 1, 0], [], []>} : vector<8x8xbf16>, vector<8x8xbf16>, vector<8x8xf32> -> vector<8x8xf32>
    %66 = vector.broadcast %16 : vector<1x8xf32> to vector<8x8xf32>
    %67 = arith.addf %65, %66 : vector<8x8xf32>
    %cst_32 = arith.constant dense<0xFF800000> : vector<8xf32>
    %68 = vector.multi_reduction <maximumf>, %67, %cst_32 [1] : vector<8x8xf32> to vector<8xf32>
    %69 = vector.shape_cast %68 : vector<8xf32> to vector<8x1xf32>
    %70 = vector.broadcast %69 : vector<8x1xf32> to vector<8x8xf32>
    %71 = arith.subf %67, %70 : vector<8x8xf32>
    %72 = math.exp %71 : vector<8x8xf32>
    %cst_33 = arith.constant dense<0.000000e+00> : vector<8xf32>
    %73 = vector.multi_reduction <add>, %72, %cst_33 [1] : vector<8x8xf32> to vector<8xf32>
    %74 = vector.shape_cast %73 : vector<8xf32> to vector<8x1xf32>
    %75 = tpu.reciprocal %74 {approx = true} : vector<8x1xf32> -> vector<8x1xf32>
    %76 = vector.broadcast %75 : vector<8x1xf32> to vector<8x8xf32>
    %77 = arith.mulf %72, %76 : vector<8x8xf32>
    %78 = arith.truncf %77 : vector<8x8xf32> to vector<8x8xbf16>
    %cst_34 = arith.constant dense<0.000000e+00> : vector<8x8xf32>
    %79 = tpu.matmul %78, %64, %cst_34 {dimension_numbers = #tpu.dot_dimension_numbers<[1], [0], [0], [1], [0, 0, 1, 1], [], []>} : vector<8x8xbf16>, vector<8x8xbf16>, vector<8x8xf32> -> vector<8x8xf32>
    %80 = arith.truncf %79 : vector<8x8xf32> to vector<8x8xbf16>
    %c16_35 = arith.constant 16 : index
    %c0_36 = arith.constant 0 : index
    %81 = vector.load %arg8[%c16_35, %c0_36] : memref<32x32xbf16, #tpu.memory_space<vmem>>, vector<8x32xbf16>
    %cst_37 = arith.constant dense<0.000000e+00> : vector<8x32xf32>
    %82 = tpu.matmul %80, %81, %cst_37 {dimension_numbers = #tpu.dot_dimension_numbers<[1], [0], [0], [1], [0, 0, 1, 1], [], []>} : vector<8x8xbf16>, vector<8x32xbf16>, vector<8x32xf32> -> vector<8x32xf32>
    %83 = arith.addf %61, %82 : vector<8x32xf32>
    %84 = vector.extract_strided_slice %14 {offsets = [0, 24], sizes = [8, 8], strides = [1, 1]} : vector<8x32xbf16> to vector<8x8xbf16>
    %c0_38 = arith.constant 0 : index
    %c24 = arith.constant 24 : index
    %85 = vector.load %arg13[%c0_38, %c24] : memref<8x64xbf16, #tpu.memory_space<vmem>>, vector<8x8xbf16>
    %c0_39 = arith.constant 0 : index
    %c56 = arith.constant 56 : index
    %86 = vector.load %arg13[%c0_39, %c56] : memref<8x64xbf16, #tpu.memory_space<vmem>>, vector<8x8xbf16>
    %cst_40 = arith.constant dense<0.000000e+00> : vector<8x8xf32>
    %87 = tpu.matmul %84, %85, %cst_40 {dimension_numbers = #tpu.dot_dimension_numbers<[1], [1], [0], [0], [0, 0, 1, 0], [], []>} : vector<8x8xbf16>, vector<8x8xbf16>, vector<8x8xf32> -> vector<8x8xf32>
    %88 = vector.broadcast %16 : vector<1x8xf32> to vector<8x8xf32>
    %89 = arith.addf %87, %88 : vector<8x8xf32>
    %cst_41 = arith.constant dense<0xFF800000> : vector<8xf32>
    %90 = vector.multi_reduction <maximumf>, %89, %cst_41 [1] : vector<8x8xf32> to vector<8xf32>
    %91 = vector.shape_cast %90 : vector<8xf32> to vector<8x1xf32>
    %92 = vector.broadcast %91 : vector<8x1xf32> to vector<8x8xf32>
    %93 = arith.subf %89, %92 : vector<8x8xf32>
    %94 = math.exp %93 : vector<8x8xf32>
    %cst_42 = arith.constant dense<0.000000e+00> : vector<8xf32>
    %95 = vector.multi_reduction <add>, %94, %cst_42 [1] : vector<8x8xf32> to vector<8xf32>
    %96 = vector.shape_cast %95 : vector<8xf32> to vector<8x1xf32>
    %97 = tpu.reciprocal %96 {approx = true} : vector<8x1xf32> -> vector<8x1xf32>
    %98 = vector.broadcast %97 : vector<8x1xf32> to vector<8x8xf32>
    %99 = arith.mulf %94, %98 : vector<8x8xf32>
    %100 = arith.truncf %99 : vector<8x8xf32> to vector<8x8xbf16>
    %cst_43 = arith.constant dense<0.000000e+00> : vector<8x8xf32>
    %101 = tpu.matmul %100, %86, %cst_43 {dimension_numbers = #tpu.dot_dimension_numbers<[1], [0], [0], [1], [0, 0, 1, 1], [], []>} : vector<8x8xbf16>, vector<8x8xbf16>, vector<8x8xf32> -> vector<8x8xf32>
    %102 = arith.truncf %101 : vector<8x8xf32> to vector<8x8xbf16>
    %c24_44 = arith.constant 24 : index
    %c0_45 = arith.constant 0 : index
    %103 = vector.load %arg8[%c24_44, %c0_45] : memref<32x32xbf16, #tpu.memory_space<vmem>>, vector<8x32xbf16>
    %cst_46 = arith.constant dense<0.000000e+00> : vector<8x32xf32>
    %104 = tpu.matmul %102, %103, %cst_46 {dimension_numbers = #tpu.dot_dimension_numbers<[1], [0], [0], [1], [0, 0, 1, 1], [], []>} : vector<8x8xbf16>, vector<8x32xbf16>, vector<8x32xf32> -> vector<8x32xf32>
    %105 = arith.addf %83, %104 : vector<8x32xf32>
    %106 = arith.addf %8, %105 : vector<8x32xf32>
    %c0_47 = arith.constant 0 : index
    %c0_48 = arith.constant 0 : index
    %107 = vector.load %arg9[%c0_47, %c0_48] : memref<1x32xf32, #tpu.memory_space<vmem>>, vector<1x32xf32>
    %108 = vector.broadcast %107 : vector<1x32xf32> to vector<8x32xf32>
    %109 = arith.addf %106, %108 : vector<8x32xf32>
    %cst_49 = arith.constant dense<0.000000e+00> : vector<8xf32>
    %110 = vector.multi_reduction <add>, %109, %cst_49 [1] : vector<8x32xf32> to vector<8xf32>
    %111 = vector.shape_cast %110 : vector<8xf32> to vector<8x1xf32>
    %cst_50 = arith.constant 3.200000e+01 : f32
    %112 = vector.broadcast %cst_50 : f32 to vector<8x1xf32>
    %113 = arith.divf %111, %112 : vector<8x1xf32>
    %114 = vector.broadcast %113 : vector<8x1xf32> to vector<8x32xf32>
    %115 = arith.subf %109, %114 : vector<8x32xf32>
    %116 = arith.mulf %115, %115 : vector<8x32xf32>
    %cst_51 = arith.constant dense<0.000000e+00> : vector<8xf32>
    %117 = vector.multi_reduction <add>, %116, %cst_51 [1] : vector<8x32xf32> to vector<8xf32>
    %118 = vector.shape_cast %117 : vector<8xf32> to vector<8x1xf32>
    %cst_52 = arith.constant 3.200000e+01 : f32
    %119 = vector.broadcast %cst_52 : f32 to vector<8x1xf32>
    %120 = arith.divf %118, %119 : vector<8x1xf32>
    %121 = vector.broadcast %113 : vector<8x1xf32> to vector<8x32xf32>
    %122 = arith.subf %109, %121 : vector<8x32xf32>
    %cst_53 = arith.constant 9.99999974E-6 : f32
    %123 = vector.broadcast %cst_53 : f32 to vector<8x1xf32>
    %124 = arith.addf %120, %123 : vector<8x1xf32>
    %125 = math.rsqrt %124 : vector<8x1xf32>
    %126 = vector.broadcast %125 : vector<8x1xf32> to vector<8x32xf32>
    %127 = arith.mulf %122, %126 : vector<8x32xf32>
    %c0_54 = arith.constant 0 : index
    %c0_55 = arith.constant 0 : index
    %128 = vector.load %arg10[%c0_54, %c0_55] : memref<1x32xf32, #tpu.memory_space<vmem>>, vector<1x32xf32>
    %129 = vector.broadcast %128 : vector<1x32xf32> to vector<8x32xf32>
    %130 = arith.mulf %127, %129 : vector<8x32xf32>
    %c0_56 = arith.constant 0 : index
    %c0_57 = arith.constant 0 : index
    %131 = vector.load %arg11[%c0_56, %c0_57] : memref<1x32xf32, #tpu.memory_space<vmem>>, vector<1x32xf32>
    %132 = vector.broadcast %131 : vector<1x32xf32> to vector<8x32xf32>
    %133 = arith.addf %130, %132 : vector<8x32xf32>
    %134 = arith.truncf %133 : vector<8x32xf32> to vector<8x32xbf16>
    %c0_58 = arith.constant 0 : index
    %c0_59 = arith.constant 0 : index
    %c0_60 = arith.constant 0 : index
    %135 = vector.load %arg12[%c0_58, %c0_59, %c0_60] : memref<1x8x32xbf16, #tpu.memory_space<vmem>>, vector<1x8x32xbf16>
    %136 = vector.shape_cast %135 : vector<1x8x32xbf16> to vector<8x32xbf16>
    %137 = vector.shape_cast %134 : vector<8x32xbf16> to vector<1x8x32xbf16>
    tpu.vector_store %arg12[%c0_58, %c0_59, %c0_60], %137 {strides = array<i32>} : memref<1x8x32xbf16, #tpu.memory_space<vmem>>, vector<1x8x32xbf16>,
    return
  }
  func.func @transform_0(%arg0: i32, %arg1: i32) -> (i32, i32, i32) {
    %c0_i32 = arith.constant 0 : i32
    %c0_i32_0 = arith.constant 0 : i32
    %c0_i32_1 = arith.constant 0 : i32
    return %arg0, %c0_i32, %c0_i32_0 : i32, i32, i32
  }
  func.func @transform_1(%arg0: i32, %arg1: i32) -> (i32, i32, i32) {
    %c0_i32 = arith.constant 0 : i32
    %c0_i32_0 = arith.constant 0 : i32
    %c0_i32_1 = arith.constant 0 : i32
    return %arg0, %c0_i32, %c0_i32_0 : i32, i32, i32
  }
  func.func @transform_2(%arg0: i32, %arg1: i32) -> (i32, i32) {
    %c0_i32 = arith.constant 0 : i32
    %c0_i32_0 = arith.constant 0 : i32
    %c0_i32_1 = arith.constant 0 : i32
    return %c0_i32, %c0_i32_0 : i32, i32
  }
  func.func @transform_3(%arg0: i32, %arg1: i32) -> (i32, i32) {
    %c0_i32 = arith.constant 0 : i32
    %c0_i32_0 = arith.constant 0 : i32
    %c0_i32_1 = arith.constant 0 : i32
    return %c0_i32, %c0_i32_0 : i32, i32
  }
  func.func @transform_4(%arg0: i32, %arg1: i32) -> (i32, i32) {
    %c0_i32 = arith.constant 0 : i32
    %c0_i32_0 = arith.constant 0 : i32
    %c0_i32_1 = arith.constant 0 : i32
    return %c0_i32, %c0_i32_0 : i32, i32
  }
  func.func @transform_5(%arg0: i32, %arg1: i32) -> (i32, i32) {
    %c0_i32 = arith.constant 0 : i32
    %c0_i32_0 = arith.constant 0 : i32
    %c0_i32_1 = arith.constant 0 : i32
    return %c0_i32, %c0_i32_0 : i32, i32
  }
  func.func @transform_6(%arg0: i32, %arg1: i32) -> (i32, i32) {
    %c0_i32 = arith.constant 0 : i32
    %c0_i32_0 = arith.constant 0 : i32
    %c0_i32_1 = arith.constant 0 : i32
    return %c0_i32, %c0_i32_0 : i32, i32
  }
  func.func @transform_7(%arg0: i32, %arg1: i32) -> (i32, i32) {
    %c0_i32 = arith.constant 0 : i32
    %c0_i32_0 = arith.constant 0 : i32
    %c0_i32_1 = arith.constant 0 : i32
    return %c0_i32, %c0_i32_0 : i32, i32
  }
  func.func @transform_8(%arg0: i32, %arg1: i32) -> (i32, i32) {
    %c0_i32 = arith.constant 0 : i32
    %c0_i32_0 = arith.constant 0 : i32
    %c0_i32_1 = arith.constant 0 : i32
    return %c0_i32, %c0_i32_0 : i32, i32
  }
  func.func @transform_9(%arg0: i32, %arg1: i32) -> (i32, i32) {
    %c0_i32 = arith.constant 0 : i32
    %c0_i32_0 = arith.constant 0 : i32
    %c0_i32_1 = arith.constant 0 : i32
    return %c0_i32, %c0_i32_0 : i32, i32
  }
  func.func @transform_10(%arg0: i32, %arg1: i32) -> (i32, i32, i32) {
    %c0_i32 = arith.constant 0 : i32
    %c0_i32_0 = arith.constant 0 : i32
    return %arg0, %arg1, %c0_i32 : i32, i32, i32
  }
}

</mosaic_0001>

<llo_original>
// kernel: tpu_custom_call.1
$region0: #{tpu_custom_call.1}
  #allocation0 [shape = 'u32[]', space=smem, size = 0x4, offset = 0x4, fixed_abs, tag = 'smem constant byte address 0x4 - core index']
  #allocation1 [shape = 'u32[144,128]{1,0:T(1,128)}', space=vmem, size = 0x12000, scoped, tag = 'internal scratch']
  #allocation2 [shape = 'bf16[8,64]{1,0:T(8,128)(2,1)}', space=vmem, size = 0x800, scoped, tag = 'scratch operand']
  %s0 = inlined_call_operand.hbm [shape: bf16[2,8,32], index: 0, kind: input, shape index: {}]
  %s1 = inlined_call_operand.vmem [shape: f32[2,1,8], index: 1, kind: input, shape index: {}]
  %s2 = inlined_call_operand.hbm [shape: bf16[32,32], index: 2, kind: input, shape index: {}]
  %s3 = inlined_call_operand.vmem [shape: f32[1,32], index: 3, kind: input, shape index: {}]
  %s4 = inlined_call_operand.hbm [shape: bf16[32,64], index: 4, kind: input, shape index: {}]
  %s5 = inlined_call_operand.vmem [shape: f32[1,64], index: 5, kind: input, shape index: {}]
  %s6 = inlined_call_operand.vmem [shape: bf16[32,32], index: 6, kind: input, shape index: {}]
  %s7 = inlined_call_operand.vmem [shape: f32[1,32], index: 7, kind: input, shape index: {}]
  %s8 = inlined_call_operand.vmem [shape: f32[1,32], index: 8, kind: input, shape index: {}]
  %s9 = inlined_call_operand.vmem [shape: f32[1,32], index: 9, kind: input, shape index: {}]
  %s10 = inlined_call_operand.hbm [shape: bf16[2,8,32], index: 10, kind: output, shape index: {}]
  %s11 = sld [smem:[#allocation0]]
  $region89: #{tpu_custom_call.1} parent=0
    _
  %s13 = ssub.s32 1, %s11
  %s14 = scalar_select 0, %s13, %s11
  $region1: #{tpu_custom_call.1} parent=0
    #allocation3 [shape = 'u8[4096]{0}', space=vmem, size = 0x1000, scoped, tag = 'input window, operand 0']
    #allocation4 [shape = 's32[2]{0}', space=sflag, size = 0x8, scoped, tag = 'scoped memory for tpu_custom_call.1']
    #allocation5 [shape = 's32[2]{0}', space=sflag, size = 0x8, scoped, tag = 'scoped memory for tpu_custom_call.1']
    #allocation6 [shape = 'u8[8192]{0}', space=vmem, size = 0x2000, scoped, tag = 'input window, operand 2, single buffered']
    #allocation7 [shape = 's32[1]{0}', space=sflag, size = 0x4, scoped, tag = 'scoped memory for tpu_custom_call.1']
    #allocation8 [shape = 'u8[8192]{0}', space=vmem, size = 0x2000, scoped, tag = 'input window, operand 4, single buffered']
    #allocation9 [shape = 'u8[4096]{0}', space=vmem, size = 0x1000, scoped, tag = 'output window, operand 0']
    %15 = vsyncpa [#allocation4], 0
    %s16 = scalar_lea.sflag [#allocation4], 1
    %17 = vsyncpa %s16, 0
    %18 = vsyncpa [#allocation7], 0
    %19 = vsyncpa [#allocation5], 0
    %s20 = scalar_lea.sflag [#allocation5], 1
    %21 = vsyncpa %s20, 0
    loop: start=0, step=1, limit=4
    $region2: #{tpu_custom_call.1} parent=1 // loop_pre_header
      _
    $region3: #{tpu_custom_call.1} parent=1 // loop_header
      %s23 = sphi 0, %s27
      %p24 = scmp.ge.s32.totalorder %s23, 4
      %s30 = sphi 0, %s42
      %s31 = sphi 0, %s38
      %s32 = sphi 0, %s30
      %s33 = sphi 0, %s31
      %s34 = sphi 0, %s32
      %s35 = sphi 0, %s33
      %s45 = sphi 0, %s47
      %s48 = sphi 0, %s45
      %s49 = sphi 0, %s48
      %s65 = sphi 0, %s49
      %s71 = sphi 0, %s73
      %s74 = sphi 0, %s71
      %s75 = sphi 0, %s74
      %s91 = sphi 0, %s75
      %s95 = sphi 0, %s95
      %s97 = sphi 0, %s95
      %s98 = sphi 0, %s97
      %s112 = sphi 0, %s98
      %s116 = sphi 0, %s116
      %s118 = sphi 0, %s116
      %s119 = sphi 0, %s118
      %s133 = sphi 0, %s119
      %s137 = sphi 0, %s137
      %s139 = sphi 0, %s137
      %s140 = sphi 0, %s139
      %s154 = sphi 0, %s140
      %s158 = sphi 0, %s158
      %s160 = sphi 0, %s158
      %s161 = sphi 0, %s160
      %s175 = sphi 0, %s161
      %s179 = sphi 0, %s179
      %s181 = sphi 0, %s179
      %s182 = sphi 0, %s181
      %s196 = sphi 0, %s182
      %s200 = sphi 0, %s200
      %s202 = sphi 0, %s200
      %s203 = sphi 0, %s202
      %s217 = sphi 0, %s203
      %s221 = sphi 0, %s221
      %s223 = sphi 0, %s221
      %s224 = sphi 0, %s223
      %s238 = sphi 0, %s224
      %s242 = sphi 0, %s242
      %s244 = sphi 0, %s242
      %s245 = sphi 0, %s244
      %s259 = sphi 0, %s245
      %s267 = sphi 0, %s269
      %s270 = sphi 0, %s267
      %s271 = sphi 0, %s270
      %s287 = sphi 0, %s271
    $region4: #{tpu_custom_call.1} parent=1 // loop_header_branch
      %26 = sbr.rel (%p24) target = $region8
    $region5: #{tpu_custom_call.1} parent=1 // loop_body
      %s28 = ssub.s32 %s23, 1
      %s29 = ssub.s32 %s23, 2
      %s36 = sadd.s32 1, %s31
      %p37 = scmp.ge.s32.totalorder %s36, 1
      %s38 = scalar_select %p37, 0, %s36
      %s39 = sadd.s32 1, %s30
      %s40 = scalar_select %p37, %s39, %s30
      %p41 = scmp.ge.s32.totalorder %s40, 2
      %s42 = scalar_select %p41, 0, %s40
      %s43 = ssub.s32 %s30, %s42
      %p44 = scmp.eq.s32.totalorder %s43, 0
      %s46 = sadd.s32 %s45, 1
      %s47 = scalar_select %p44, %s45, %s46
      %p50 = pneg %p44
      %p51 = scmp.eq.s32.totalorder %s23, 1
      %p52 = por %p50, %p51
      %p53 = scmp.ne.s32.totalorder %s45, %s48
      %p54 = scmp.eq.s32.totalorder %s23, 0
      %p55 = por %p53, %p54
      %p56 = scmp.ne.s32.totalorder %s45, %s48
      %p57 = scmp.eq.s32.totalorder %s28, 1
      %p58 = por %p56, %p57
      %p59 = scmp.ne.s32.totalorder %s48, %s49
      %p60 = scmp.eq.s32.totalorder %s28, 0
      %p61 = por %p59, %p60
      %p62 = scmp.ne.s32.totalorder %s48, %s49
      %p63 = scmp.eq.s32.totalorder %s29, 1
      %p64 = por %p62, %p63
      %p66 = scmp.ne.s32.totalorder %s49, %s65
      %p67 = scmp.eq.s32.totalorder %s29, 0
      %p68 = por %p66, %p67
      %s69 = ssub.s32 %s30, %s42
      %p70 = scmp.eq.s32.totalorder %s69, 0
      %s72 = sadd.s32 %s71, 1
      %s73 = scalar_select %p70, %s71, %s72
      %p76 = pneg %p70
      %p77 = scmp.eq.s32.totalorder %s23, 1
      %p78 = por %p76, %p77
      %p79 = scmp.ne.s32.totalorder %s71, %s74
      %p80 = scmp.eq.s32.totalorder %s23, 0
      %p81 = por %p79, %p80
      %p82 = scmp.ne.s32.totalorder %s71, %s74
      %p83 = scmp.eq.s32.totalorder %s28, 1
      %p84 = por %p82, %p83
      %p85 = scmp.ne.s32.totalorder %s74, %s75
      %p86 = scmp.eq.s32.totalorder %s28, 0
      %p87 = por %p85, %p86
      %p88 = scmp.ne.s32.totalorder %s74, %s75
      %p89 = scmp.eq.s32.totalorder %s29, 1
      %p90 = por %p88, %p89
      %p92 = scmp.ne.s32.totalorder %s75, %s91
      %p93 = scmp.eq.s32.totalorder %s29, 0
      %p94 = por %p92, %p93
      %s96 = sadd.s32 %s95, 1
      %p99 = scmp.eq.s32.totalorder %s23, 1
      %p100 = scmp.ne.s32.totalorder %s95, %s97
      %p101 = scmp.eq.s32.totalorder %s23, 0
      %p102 = por %p100, %p101
      %p103 = scmp.ne.s32.totalorder %s95, %s97
      %p104 = scmp.eq.s32.totalorder %s28, 1
      %p105 = por %p103, %p104
      %p106 = scmp.ne.s32.totalorder %s97, %s98
      %p107 = scmp.eq.s32.totalorder %s28, 0
      %p108 = por %p106, %p107
      %p109 = scmp.ne.s32.totalorder %s97, %s98
      %p110 = scmp.eq.s32.totalorder %s29, 1
      %p111 = por %p109, %p110
      %p113 = scmp.ne.s32.totalorder %s98, %s112
      %p114 = scmp.eq.s32.totalorder %s29, 0
      %p115 = por %p113, %p114
      %s117 = sadd.s32 %s116, 1
      %p120 = scmp.eq.s32.totalorder %s23, 1
      %p121 = scmp.ne.s32.totalorder %s116, %s118
      %p122 = scmp.eq.s32.totalorder %s23, 0
      %p123 = por %p121, %p122
      %p124 = scmp.ne.s32.totalorder %s116, %s118
      %p125 = scmp.eq.s32.totalorder %s28, 1
      %p126 = por %p124, %p125
      %p127 = scmp.ne.s32.totalorder %s118, %s119
      %p128 = scmp.eq.s32.totalorder %s28, 0
      %p129 = por %p127, %p128
      %p130 = scmp.ne.s32.totalorder %s118, %s119
      %p131 = scmp.eq.s32.totalorder %s29, 1
      %p132 = por %p130, %p131
      %p134 = scmp.ne.s32.totalorder %s119, %s133
      %p135 = scmp.eq.s32.totalorder %s29, 0
      %p136 = por %p134, %p135
      %s138 = sadd.s32 %s137, 1
      %p141 = scmp.eq.s32.totalorder %s23, 1
      %p142 = scmp.ne.s32.totalorder %s137, %s139
      %p143 = scmp.eq.s32.totalorder %s23, 0
      %p144 = por %p142, %p143
      %p145 = scmp.ne.s32.totalorder %s137, %s139
      %p146 = scmp.eq.s32.totalorder %s28, 1
      %p147 = por %p145, %p146
      %p148 = scmp.ne.s32.totalorder %s139, %s140
      %p149 = scmp.eq.s32.totalorder %s28, 0
      %p150 = por %p148, %p149
      %p151 = scmp.ne.s32.totalorder %s139, %s140
      %p152 = scmp.eq.s32.totalorder %s29, 1
      %p153 = por %p151, %p152
      %p155 = scmp.ne.s32.totalorder %s140, %s154
      %p156 = scmp.eq.s32.totalorder %s29, 0
      %p157 = por %p155, %p156
      %s159 = sadd.s32 %s158, 1
      %p162 = scmp.eq.s32.totalorder %s23, 1
      %p163 = scmp.ne.s32.totalorder %s158, %s160
      %p164 = scmp.eq.s32.totalorder %s23, 0
      %p165 = por %p163, %p164
      %p166 = scmp.ne.s32.totalorder %s158, %s160
      %p167 = scmp.eq.s32.totalorder %s28, 1
      %p168 = por %p166, %p167
      %p169 = scmp.ne.s32.totalorder %s160, %s161
      %p170 = scmp.eq.s32.totalorder %s28, 0
      %p171 = por %p169, %p170
      %p172 = scmp.ne.s32.totalorder %s160, %s161
      %p173 = scmp.eq.s32.totalorder %s29, 1
      %p174 = por %p172, %p173
      %p176 = scmp.ne.s32.totalorder %s161, %s175
      %p177 = scmp.eq.s32.totalorder %s29, 0
      %p178 = por %p176, %p177
      %s180 = sadd.s32 %s179, 1
      %p183 = scmp.eq.s32.totalorder %s23, 1
      %p184 = scmp.ne.s32.totalorder %s179, %s181
      %p185 = scmp.eq.s32.totalorder %s23, 0
      %p186 = por %p184, %p185
      %p187 = scmp.ne.s32.totalorder %s179, %s181
      %p188 = scmp.eq.s32.totalorder %s28, 1
      %p189 = por %p187, %p188
      %p190 = scmp.ne.s32.totalorder %s181, %s182
      %p191 = scmp.eq.s32.totalorder %s28, 0
      %p192 = por %p190, %p191
      %p193 = scmp.ne.s32.totalorder %s181, %s182
      %p194 = scmp.eq.s32.totalorder %s29, 1
      %p195 = por %p193, %p194
      %p197 = scmp.ne.s32.totalorder %s182, %s196
      %p198 = scmp.eq.s32.totalorder %s29, 0
      %p199 = por %p197, %p198
      %s201 = sadd.s32 %s200, 1
      %p204 = scmp.eq.s32.totalorder %s23, 1
      %p205 = scmp.ne.s32.totalorder %s200, %s202
      %p206 = scmp.eq.s32.totalorder %s23, 0
      %p207 = por %p205, %p206
      %p208 = scmp.ne.s32.totalorder %s200, %s202
      %p209 = scmp.eq.s32.totalorder %s28, 1
      %p210 = por %p208, %p209
      %p211 = scmp.ne.s32.totalorder %s202, %s203
      %p212 = scmp.eq.s32.totalorder %s28, 0
      %p213 = por %p211, %p212
      %p214 = scmp.ne.s32.totalorder %s202, %s203
      %p215 = scmp.eq.s32.totalorder %s29, 1
      %p216 = por %p214, %p215
      %p218 = scmp.ne.s32.totalorder %s203, %s217
      %p219 = scmp.eq.s32.totalorder %s29, 0
      %p220 = por %p218, %p219
      %s222 = sadd.s32 %s221, 1
      %p225 = scmp.eq.s32.totalorder %s23, 1
      %p226 = scmp.ne.s32.totalorder %s221, %s223
      %p227 = scmp.eq.s32.totalorder %s23, 0
      %p228 = por %p226, %p227
      %p229 = scmp.ne.s32.totalorder %s221, %s223
      %p230 = scmp.eq.s32.totalorder %s28, 1
      %p231 = por %p229, %p230
      %p232 = scmp.ne.s32.totalorder %s223, %s224
      %p233 = scmp.eq.s32.totalorder %s28, 0
      %p234 = por %p232, %p233
      %p235 = scmp.ne.s32.totalorder %s223, %s224
      %p236 = scmp.eq.s32.totalorder %s29, 1
      %p237 = por %p235, %p236
      %p239 = scmp.ne.s32.totalorder %s224, %s238
      %p240 = scmp.eq.s32.totalorder %s29, 0
      %p241 = por %p239, %p240
      %s243 = sadd.s32 %s242, 1
      %p246 = scmp.eq.s32.totalorder %s23, 1
      %p247 = scmp.ne.s32.totalorder %s242, %s244
      %p248 = scmp.eq.s32.totalorder %s23, 0
      %p249 = por %p247, %p248
      %p250 = scmp.ne.s32.totalorder %s242, %s244
      %p251 = scmp.eq.s32.totalorder %s28, 1
      %p252 = por %p250, %p251
      %p253 = scmp.ne.s32.totalorder %s244, %s245
      %p254 = scmp.eq.s32.totalorder %s28, 0
      %p255 = por %p253, %p254
      %p256 = scmp.ne.s32.totalorder %s244, %s245
      %p257 = scmp.eq.s32.totalorder %s29, 1
      %p258 = por %p256, %p257
      %p260 = scmp.ne.s32.totalorder %s245, %s259
      %p261 = scmp.eq.s32.totalorder %s29, 0
      %p262 = por %p260, %p261
      %s263 = ssub.s32 %s30, %s42
      %s264 = ssub.s32 %s31, %s38
      %s265 = sor.u32 %s263, %s264
      %p266 = scmp.eq.s32.totalorder %s265, 0
      %s268 = sadd.s32 %s267, 1
      %s269 = scalar_select %p266, %s267, %s268
      %p272 = pneg %p266
      %p273 = scmp.eq.s32.totalorder %s23, 1
      %p274 = por %p272, %p273
      %p275 = scmp.ne.s32.totalorder %s267, %s270
      %p276 = scmp.eq.s32.totalorder %s23, 0
      %p277 = por %p275, %p276
      %p278 = scmp.ne.s32.totalorder %s267, %s270
      %p279 = scmp.eq.s32.totalorder %s28, 1
      %p280 = por %p278, %p279
      %p281 = scmp.ne.s32.totalorder %s270, %s271
      %p282 = scmp.eq.s32.totalorder %s28, 0
      %p283 = por %p281, %p282
      %p284 = scmp.ne.s32.totalorder %s270, %s271
      %p285 = scmp.eq.s32.totalorder %s29, 1
      %p286 = por %p284, %p285
      %p288 = scmp.ne.s32.totalorder %s271, %s287
      %p289 = scmp.eq.s32.totalorder %s29, 0
      %p290 = por %p288, %p289
      %p291 = scmp.le.s32.totalorder 1, %s23
      %p292 = scmp.lt.s32.totalorder %s23, 3
      %p293 = pnand %p291, %p292
      %p294 = pneg %p293
      // Predicated region
      $region9: #{tpu_custom_call.1} parent=5 // pred_check
        _
      $region10: #{tpu_custom_call.1} parent=5 // pred_check_branch
        %296 = sbr.rel (%p293) target = $region12
      $region11: #{tpu_custom_call.1} parent=5 // pred_region
        %s297 = ssub.s32 %s23, 1
        // Predicated region
        $region13: #{tpu_custom_call.1} parent=11 // pred_check
          %p298 = pneg %p108
        $region14: #{tpu_custom_call.1} parent=11 // pred_check_branch
          %300 = sbr.rel (%p298) target = $region16
        $region15: #{tpu_custom_call.1} parent=11 // pred_region
          %s302 = ssub.s32 256, 256
          %303 = vsyncadd [#allocation7], %s302
          %s304 = sshll.u32 [#allocation6], 4
          %s305 = int_to_ptr.vmem [resolvable:$true] %s304
          %310 = dma.hbm_to_vmem [thread:$0]  %s2, 256, %s305, [#allocation7], 64, 64, 4
        $region16: #{tpu_custom_call.1} parent=11 // pred_fallthru
          _
        // Predicated region
        $region17: #{tpu_custom_call.1} parent=11 // pred_check
          %p311 = pneg %p129
        $region18: #{tpu_custom_call.1} parent=11 // pred_check_branch
          %313 = sbr.rel (%p311) target = $region20
        $region19: #{tpu_custom_call.1} parent=11 // pred_region
          _
        $region20: #{tpu_custom_call.1} parent=11 // pred_fallthru
          _
        // Predicated region
        $region21: #{tpu_custom_call.1} parent=11 // pred_check
          %p314 = pneg %p150
        $region22: #{tpu_custom_call.1} parent=11 // pred_check_branch
          %316 = sbr.rel (%p314) target = $region24
        $region23: #{tpu_custom_call.1} parent=11 // pred_region
          %s318 = ssub.s32 256, 256
          %319 = vsyncadd [#allocation7], %s318
          %s320 = sshll.u32 [#allocation8], 4
          %s321 = int_to_ptr.vmem [resolvable:$true] %s320
          %326 = dma.hbm_to_vmem [thread:$0]  %s4, 256, %s321, [#allocation7], 64, 64, 4
        $region24: #{tpu_custom_call.1} parent=11 // pred_fallthru
          _
        // Predicated region
        $region25: #{tpu_custom_call.1} parent=11 // pred_check
          %p327 = pneg %p171
        $region26: #{tpu_custom_call.1} parent=11 // pred_check_branch
          %329 = sbr.rel (%p327) target = $region28
        $region27: #{tpu_custom_call.1} parent=11 // pred_region
          _
        $region28: #{tpu_custom_call.1} parent=11 // pred_fallthru
          _
        // Predicated region
        $region29: #{tpu_custom_call.1} parent=11 // pred_check
          %p330 = pneg %p192
        $region30: #{tpu_custom_call.1} parent=11 // pred_check_branch
          %332 = sbr.rel (%p330) target = $region32
        $region31: #{tpu_custom_call.1} parent=11 // pred_region
          _
        $region32: #{tpu_custom_call.1} parent=11 // pred_fallthru
          _
        // Predicated region
        $region33: #{tpu_custom_call.1} parent=11 // pred_check
          %p333 = pneg %p213
        $region34: #{tpu_custom_call.1} parent=11 // pred_check_branch
          %335 = sbr.rel (%p333) target = $region36
        $region35: #{tpu_custom_call.1} parent=11 // pred_region
          _
        $region36: #{tpu_custom_call.1} parent=11 // pred_fallthru
          _
        // Predicated region
        $region37: #{tpu_custom_call.1} parent=11 // pred_check
          %p336 = pneg %p234
        $region38: #{tpu_custom_call.1} parent=11 // pred_check_branch
          %338 = sbr.rel (%p336) target = $region40
        $region39: #{tpu_custom_call.1} parent=11 // pred_region
          _
        $region40: #{tpu_custom_call.1} parent=11 // pred_fallthru
          _
        // Predicated region
        $region41: #{tpu_custom_call.1} parent=11 // pred_check
          %p339 = pneg %p255
        $region42: #{tpu_custom_call.1} parent=11 // pred_check_branch
          %341 = sbr.rel (%p339) target = $region44
        $region43: #{tpu_custom_call.1} parent=11 // pred_region
          _
        $region44: #{tpu_custom_call.1} parent=11 // pred_fallthru
          _
      $region12: #{tpu_custom_call.1} parent=5 // pred_fallthru
        _
      %p342 = scmp.lt.s32.totalorder %s23, 2
      // Predicated region
      $region45: #{tpu_custom_call.1} parent=5 // pred_check
        %p343 = pneg %p342
      $region46: #{tpu_custom_call.1} parent=5 // pred_check_branch
        %345 = sbr.rel (%p343) target = $region48
      $region47: #{tpu_custom_call.1} parent=5 // pred_region
        // Predicated region
        $region49: #{tpu_custom_call.1} parent=47 // pred_check
          %p346 = pneg %p55
        $region50: #{tpu_custom_call.1} parent=47 // pred_check_branch
          %348 = sbr.rel (%p346) target = $region52
        $region51: #{tpu_custom_call.1} parent=47 // pred_region
          %s349 = sand.u32 %s45, 1
          %s350 = scalar_lea.sflag [#allocation4], %s349
          %s351 = sand.u32 %s45, 1
          %s352 = smul.addr %s351, 4
          %s353 = scalar_lea.vmem [#allocation3], %s352
          %s355 = ssub.s32 64, 64
          %356 = vsyncadd %s350, %s355
          %s357 = smul.addr %s30, 64
          %s358 = scalar_lea.hbm %s0, %s357
          %s360 = sshll.u32 %s353, 4
          %s361 = int_to_ptr.vmem [resolvable:$true] %s360
          %363 = dma.hbm_to_vmem [thread:$0]  %s358, 64, %s361, %s350
        $region52: #{tpu_custom_call.1} parent=47 // pred_fallthru
          _
        // Predicated region
        $region53: #{tpu_custom_call.1} parent=47 // pred_check
          %p364 = pneg %p81
        $region54: #{tpu_custom_call.1} parent=47 // pred_check_branch
          %366 = sbr.rel (%p364) target = $region56
        $region55: #{tpu_custom_call.1} parent=47 // pred_region
          %p367 = scmp.lt.s32.totalorder %s30, 1
          %s368 = scalar_select %p367, %s30, 1
          %s369 = scalar_lea.vmem %s1, %s368
        $region56: #{tpu_custom_call.1} parent=47 // pred_fallthru
          _
      $region48: #{tpu_custom_call.1} parent=5 // pred_fallthru
        _
      %p370 = scmp.le.s32.totalorder 1, %s23
      %p371 = scmp.lt.s32.totalorder %s23, 3
      %p372 = pnand %p370, %p371
      %p373 = pneg %p372
      // Predicated region
      $region57: #{tpu_custom_call.1} parent=5 // pred_check
        _
      $region58: #{tpu_custom_call.1} parent=5 // pred_check_branch
        %375 = sbr.rel (%p372) target = $region60
      $region59: #{tpu_custom_call.1} parent=5 // pred_region
        %s376 = ssub.s32 %s23, 1
        %s377 = sand.u32 %s48, 1
        %s378 = scalar_lea.sflag [#allocation4], %s377
        %s379 = sand.u32 %s48, 1
        %s380 = smul.addr %s379, 4
        %s381 = scalar_lea.vmem [#allocation3], %s380
        // Predicated region
        $region61: #{tpu_custom_call.1} parent=59 // pred_check
          %p382 = pneg %p61
        $region62: #{tpu_custom_call.1} parent=59 // pred_check_branch
          %384 = sbr.rel (%p382) target = $region64
        $region63: #{tpu_custom_call.1} parent=59 // pred_region
          %385 = dma.done %s378, 64
        $region64: #{tpu_custom_call.1} parent=59 // pred_fallthru
          _
        // Predicated region
        $region65: #{tpu_custom_call.1} parent=59 // pred_check
          %p386 = pneg %p108
        $region66: #{tpu_custom_call.1} parent=59 // pred_check_branch
          %388 = sbr.rel (%p386) target = $region68
        $region67: #{tpu_custom_call.1} parent=59 // pred_region
          %389 = dma.done [#allocation7], 256
        $region68: #{tpu_custom_call.1} parent=59 // pred_fallthru
          _
        // Predicated region
        $region69: #{tpu_custom_call.1} parent=59 // pred_check
          %p390 = pneg %p150
        $region70: #{tpu_custom_call.1} parent=59 // pred_check_branch
          %392 = sbr.rel (%p390) target = $region72
        $region71: #{tpu_custom_call.1} parent=59 // pred_region
          %393 = dma.done [#allocation7], 256
        $region72: #{tpu_custom_call.1} parent=59 // pred_fallthru
          _
        %s394 = sand.u32 %s48, 1
        %s395 = scalar_lea.sflag [#allocation4], %s394
        %s396 = sand.u32 %s48, 1
        %s397 = smul.addr %s396, 4
        %s398 = scalar_lea.vmem [#allocation3], %s397
        %p399 = pneg %p61
        %p400 = pneg %p58
        %p401 = scmp.lt.s32.totalorder %s32, 1
        %s402 = scalar_select %p401, %s32, 1
        %s403 = scalar_lea.vmem %s1, %s402
        %p404 = pneg %p87
        %p405 = pneg %p84
        %p406 = pneg %p108
        %p407 = pneg %p105
        %p408 = pneg %p129
        %p409 = pneg %p126
        %p410 = pneg %p150
        %p411 = pneg %p147
        %p412 = pneg %p171
        %p413 = pneg %p168
        %p414 = pneg %p192
        %p415 = pneg %p189
        %p416 = pneg %p213
        %p417 = pneg %p210
        %p418 = pneg %p234
        %p419 = pneg %p231
        %p420 = pneg %p255
        %p421 = pneg %p252
        %p422 = pneg %p283
        %p423 = pneg %p280
        %s424 = sand.u32 %s270, 1
        %s425 = scalar_lea.sflag [#allocation5], %s424
        %s426 = sand.u32 %s270, 1
        %s427 = smul.addr %s426, 4
        %s428 = scalar_lea.vmem [#allocation9], %s427
        %p429 = scmp.lt.s32.totalorder %s32, 1
        %s430 = scalar_select %p429, %s32, 1
        %s431 = scalar_lea.vmem %s1, %s430
        %p433 = scmp.eq.s32.totalorder %s33, 0
        // Predicated region
        $region73: #{tpu_custom_call.1} parent=59 // pred_check
          %p434 = pneg %p433
        $region74: #{tpu_custom_call.1} parent=59 // pred_check_branch
          %436 = sbr.rel (%p434) target = $region76
        $region75: #{tpu_custom_call.1} parent=59 // pred_region
          %v437 = vld [vmem:[%s381] sm:$0xf]
          %v438 = vld [vmem:[#allocation8] sm:$0xf]
          %v439 = vld [vmem:[#allocation8 + $0x4] sm:$0xf]
          %v440 = vld [vmem:[#allocation8 + $0x8] sm:$0xf]
          %v441 = vld [vmem:[#allocation8 + $0xc] sm:$0xf]
          %v442 = vld [vmem:[%s5] sm:$0x1]
          %v444 = vlaneseq
          %v445 = vshrl.u32 %v444, 7
          %v446 = vsub.s32 0, %v445
          %v447 = vrot.slane %v442, %v446
          %v453 = vunpack.c.l.b16 %v438
          %v454 = vunpack.c.l.b16 %v439
          %v455 = vunpack.c.l.b16 %v440
          %v456 = vunpack.c.l.b16 %v441
          %v457 = vpack.c.b16 %v454, %v453
          %v458 = vpack.c.b16 %v456, %v455
          %vm461 = vcmask 261120
          %v463 = vsel %vm461, %v437, 0
          %465 = vmatprep.subr.bf16.mxu0 0
          %466 = vmatpush1.bf16.msra.mxu0 %v457
          %467 = vmatprep.subr.bf16.mxu0 0
          %468 = vmatpush1.bf16.msra.mxu0 %v458
          %469 = vmatprep.subr.bf16.mxu0 0
          %470 = vmatpush1.bf16.msra.mxu0 0
          %471 = vmatprep.subr.bf16.mxu0 0
          %472 = vmatpush1.bf16.msra.mxu0 0
          %473 = vmatprep.subr.bf16.mxu0 0
          %474 = vmatpush1.bf16.msra.mxu0 0
          %475 = vmatprep.subr.bf16.mxu0 0
          %476 = vmatpush1.bf16.msra.mxu0 0
          %477 = vmatprep.subr.bf16.mxu0 0
          %478 = vmatpush1.bf16.msra.mxu0 0
          %479 = vmatprep.subr.bf16.mxu0 0
          %480 = vmatpush1.bf16.msra.mxu0 0
          %481 = vmatprep.subr.bf16.mxu0 0
          %482 = vmatpush1.bf16.msra.mxu0 0
          %483 = vmatprep.subr.bf16.mxu0 0
          %484 = vmatpush1.bf16.msra.mxu0 0
          %485 = vmatprep.subr.bf16.mxu0 0
          %486 = vmatpush1.bf16.msra.mxu0 0
          %487 = vmatprep.subr.bf16.mxu0 0
          %488 = vmatpush1.bf16.msra.mxu0 0
          %489 = vmatprep.subr.bf16.mxu0 0
          %490 = vmatpush1.bf16.msra.mxu0 0
          %491 = vmatprep.subr.bf16.mxu0 0
          %492 = vmatpush1.bf16.msra.mxu0 0
          %493 = vmatprep.subr.bf16.mxu0 0
          %494 = vmatpush1.bf16.msra.mxu0 0
          %495 = vmatprep.subr.bf16.mxu0 0
          %496 = vmatpush1.bf16.msra.mxu0 0
          %497 = vmatprep.mubr.bf16.mxu0 0
          %498 = vmatmul.mubr.bf16.gmra.mrb[0].mxu0 %v463
          %v499 = vpop.f32.mrb[0].mxu0
          %v500 = vadd.f32 %v447, %v499
          %v501 = vpop.f32.mrb[0].mxu0
          %v502 = vpop.f32.mrb[0].mxu0
          %v503 = vpop.f32.mrb[0].mxu0
          %504 = vdwg.mxu0
          %v505 = vpack.c.bf16 %v500, %v500
          %vm506 = vcmask 519168
          %507 = vst.msk [vmem:[#allocation2] sm:$0xf] %vm506, %v505
        $region76: #{tpu_custom_call.1} parent=59 // pred_fallthru
          _
        %s508 = smul.u32 %s33, 8
        %s509 = sshra.s32 %s508, 3
        %s510 = sand.u32 %s508, 7
        %s511 = smul.addr %s509, 4
        %s512 = scalar_lea.vmem %s381, %s511 [#allocation3]
        %v513 = vld [vmem:[%s512] sm:$0xf]
        %v514 = vunpack.c.l.bf16 %v513
        %v515 = vld [vmem:[#allocation6] sm:$0xf]
        %v516 = vld [vmem:[#allocation6 + $0x4] sm:$0xf]
        %v517 = vld [vmem:[#allocation6 + $0x8] sm:$0xf]
        %v518 = vld [vmem:[#allocation6 + $0xc] sm:$0xf]
        %v519 = vld [vmem:[%s3] sm:$0x1]
        %v521 = vlaneseq
        %v522 = vshrl.u32 %v521, 7
        %v523 = vsub.s32 0, %v522
        %v524 = vrot.slane %v519, %v523
        %v530 = vunpack.c.l.b16 %v515
        %v531 = vunpack.c.l.b16 %v516
        %v532 = vunpack.c.l.b16 %v517
        %v533 = vunpack.c.l.b16 %v518
        %v534 = vpack.c.b16 %v531, %v530
        %v535 = vpack.c.b16 %v533, %v532
        %vm538 = vcmask 261120
        %v540 = vsel %vm538, %v513, 0
        %542 = vmatprep.subr.bf16.mxu0 0
        %543 = vmatpush1.bf16.msra.mxu0 %v534
        %544 = vmatprep.subr.bf16.mxu0 0
        %545 = vmatpush1.bf16.msra.mxu0 %v535
        %546 = vmatprep.subr.bf16.mxu0 0
        %547 = vmatpush1.bf16.msra.mxu0 0
        %548 = vmatprep.subr.bf16.mxu0 0
        %549 = vmatpush1.bf16.msra.mxu0 0
        %550 = vmatprep.subr.bf16.mxu0 0
        %551 = vmatpush1.bf16.msra.mxu0 0
        %552 = vmatprep.subr.bf16.mxu0 0
        %553 = vmatpush1.bf16.msra.mxu0 0
        %554 = vmatprep.subr.bf16.mxu0 0
        %555 = vmatpush1.bf16.msra.mxu0 0
        %556 = vmatprep.subr.bf16.mxu0 0
        %557 = vmatpush1.bf16.msra.mxu0 0
        %558 = vmatprep.subr.bf16.mxu0 0
        %559 = vmatpush1.bf16.msra.mxu0 0
        %560 = vmatprep.subr.bf16.mxu0 0
        %561 = vmatpush1.bf16.msra.mxu0 0
        %562 = vmatprep.subr.bf16.mxu0 0
        %563 = vmatpush1.bf16.msra.mxu0 0
        %564 = vmatprep.subr.bf16.mxu0 0
        %565 = vmatpush1.bf16.msra.mxu0 0
        %566 = vmatprep.subr.bf16.mxu0 0
        %567 = vmatpush1.bf16.msra.mxu0 0
        %568 = vmatprep.subr.bf16.mxu0 0
        %569 = vmatpush1.bf16.msra.mxu0 0
        %570 = vmatprep.subr.bf16.mxu0 0
        %571 = vmatpush1.bf16.msra.mxu0 0
        %572 = vmatprep.subr.bf16.mxu0 0
        %573 = vmatpush1.bf16.msra.mxu0 0
        %574 = vmatprep.mubr.bf16.mxu0 0
        %575 = vmatmul.mubr.bf16.gmra.mrb[0].mxu0 %v540
        %v576 = vpop.f32.mrb[0].mxu0
        %v577 = vadd.f32 %v524, %v576
        %v578 = vpop.f32.mrb[0].mxu0
        %v579 = vpop.f32.mrb[0].mxu0
        %v580 = vpop.f32.mrb[0].mxu0
        %581 = vdwg.mxu0
        %v582 = vpack.c.bf16 %v577, %v577
        %v583 = vld [vmem:[%s431] sm:$0x1]
        %v584 = vld [vmem:[#allocation2] sm:$0xf]
        %v586 = vlaneseq
        %v587 = vshrl.u32 %v586, 7
        %v588 = vsub.s32 0, %v587
        %v589 = vrot.slane %v583, %v588
        %vm591 = vcmask 64512
        %v593 = vsel %vm591, %v582, 0
        %v596 = vsel %vm591, %v584, 0
        %598 = vmatprep.subr.bf16.mxu0 0
        %599 = vmatpush1.bf16.xpose.msra.mxu0 %v596
        %600 = vmatprep.subr.bf16.mxu0 0
        %601 = vmatpush1.bf16.xpose.msra.mxu0 0
        %602 = vmatprep.subr.bf16.mxu0 0
        %603 = vmatpush1.bf16.xpose.msra.mxu0 0
        %604 = vmatprep.subr.bf16.mxu0 0
        %605 = vmatpush1.bf16.xpose.msra.mxu0 0
        %606 = vmatprep.subr.bf16.mxu0 0
        %607 = vmatpush1.bf16.xpose.msra.mxu0 0
        %608 = vmatprep.subr.bf16.mxu0 0
        %609 = vmatpush1.bf16.xpose.msra.mxu0 0
        %610 = vmatprep.subr.bf16.mxu0 0
        %611 = vmatpush1.bf16.xpose.msra.mxu0 0
        %612 = vmatprep.subr.bf16.mxu0 0
        %613 = vmatpush1.bf16.xpose.msra.mxu0 0
        %614 = vmatprep.subr.bf16.mxu0 0
        %615 = vmatpush1.bf16.xpose.msra.mxu0 0
        %616 = vmatprep.subr.bf16.mxu0 0
        %617 = vmatpush1.bf16.xpose.msra.mxu0 0
        %618 = vmatprep.subr.bf16.mxu0 0
        %619 = vmatpush1.bf16.xpose.msra.mxu0 0
        %620 = vmatprep.subr.bf16.mxu0 0
        %621 = vmatpush1.bf16.xpose.msra.mxu0 0
        %622 = vmatprep.subr.bf16.mxu0 0
        %623 = vmatpush1.bf16.xpose.msra.mxu0 0
        %624 = vmatprep.subr.bf16.mxu0 0
        %625 = vmatpush1.bf16.xpose.msra.mxu0 0
        %626 = vmatprep.subr.bf16.mxu0 0
        %627 = vmatpush1.bf16.xpose.msra.mxu0 0
        %628 = vmatprep.subr.bf16.mxu0 0
        %629 = vmatpush1.bf16.xpose.msra.mxu0 0
        %630 = vmatprep.mubr.bf16.mxu0 0
        %631 = vmatmul.mubr.bf16.gmra.mrb[0].mxu0 %v593
        %v632 = vpop.f32.mrb[0].mxu0
        %v633 = vadd.f32 %v589, %v632
        %v634 = vpop.f32.mrb[0].mxu0
        %v635 = vpop.f32.mrb[0].mxu0
        %v636 = vpop.f32.mrb[0].mxu0
        %637 = vdwg.mxu0
        %v638 = vsel %vm591, %v633, -inf
        %639 = vmax.xlane.f32.xlu0 %v638
        %v640 = vpop.xlane.xlu0 %639
        %v641 = vsub.f32 %v633, %v640
        %v642 = vmul.f32 %v641, 1.442695
        %v643 = vpow.pop %v642
        %v644 = vsel %vm591, %v643, 0.0
        %645 = vadd.xlane.f32.xlu0 %v644
        %v646 = vpop.xlane.xlu0 %645
        %v647 = vrcp.pop %v646
        %v648 = vmul.f32 %v643, %v647
        %v649 = vpack.c.bf16 %v648, %v648
        %v651 = vunpack.c.l.b16 %v584
        %v652 = vpack.c.b16 %v651, %v651
        %653 = vrot.lane.b32.xlu0 %v652, 96
        %v654 = vpop.permute.xlu0 %653
        %v656 = vsel %vm591, %v649, 0
        %vm658 = vcmask 1043456
        %v660 = vsel %vm658, %v654, 0
        %662 = vmatprep.subr.bf16.mxu0 0
        %663 = vmatpush1.bf16.msra.mxu0 %v660
        %664 = vmatprep.subr.bf16.mxu0 0
        %665 = vmatpush1.bf16.msra.mxu0 0
        %666 = vmatprep.subr.bf16.mxu0 0
        %667 = vmatpush1.bf16.msra.mxu0 0
        %668 = vmatprep.subr.bf16.mxu0 0
        %669 = vmatpush1.bf16.msra.mxu0 0
        %670 = vmatprep.subr.bf16.mxu0 0
        %671 = vmatpush1.bf16.msra.mxu0 0
        %672 = vmatprep.subr.bf16.mxu0 0
        %673 = vmatpush1.bf16.msra.mxu0 0
        %674 = vmatprep.subr.bf16.mxu0 0
        %675 = vmatpush1.bf16.msra.mxu0 0
        %676 = vmatprep.subr.bf16.mxu0 0
        %677 = vmatpush1.bf16.msra.mxu0 0
        %678 = vmatprep.subr.bf16.mxu0 0
        %679 = vmatpush1.bf16.msra.mxu0 0
        %680 = vmatprep.subr.bf16.mxu0 0
        %681 = vmatpush1.bf16.msra.mxu0 0
        %682 = vmatprep.subr.bf16.mxu0 0
        %683 = vmatpush1.bf16.msra.mxu0 0
        %684 = vmatprep.subr.bf16.mxu0 0
        %685 = vmatpush1.bf16.msra.mxu0 0
        %686 = vmatprep.subr.bf16.mxu0 0
        %687 = vmatpush1.bf16.msra.mxu0 0
        %688 = vmatprep.subr.bf16.mxu0 0
        %689 = vmatpush1.bf16.msra.mxu0 0
        %690 = vmatprep.subr.bf16.mxu0 0
        %691 = vmatpush1.bf16.msra.mxu0 0
        %692 = vmatprep.subr.bf16.mxu0 0
        %693 = vmatpush1.bf16.msra.mxu0 0
        %694 = vmatprep.mubr.bf16.mxu0 0
        %695 = vmatmul.mubr.bf16.gmra.mrb[0].mxu0 %v656
        %v696 = vpop.f32.mrb[0].mxu0
        %v697 = vadd.f32 0.0, %v696
        %v698 = vpop.f32.mrb[0].mxu0
        %v699 = vpop.f32.mrb[0].mxu0
        %v700 = vpop.f32.mrb[0].mxu0
        %701 = vdwg.mxu0
        %v702 = vpack.c.bf16 %v697, %v697
        %v703 = vld [vmem:[%s6] sm:$0xf]
        %705 = vrot.lane.b32.xlu0 %v582, 120
        %v706 = vpop.permute.xlu0 %705
        %707 = vrot.lane.b32.xlu0 %v652, 120
        %v708 = vpop.permute.xlu0 %707
        %v710 = vsel %vm591, %v706, 0
        %v713 = vsel %vm591, %v708, 0
        %715 = vmatprep.subr.bf16.mxu0 0
        %716 = vmatpush1.bf16.xpose.msra.mxu0 %v713
        %717 = vmatprep.subr.bf16.mxu0 0
        %718 = vmatpush1.bf16.xpose.msra.mxu0 0
        %719 = vmatprep.subr.bf16.mxu0 0
        %720 = vmatpush1.bf16.xpose.msra.mxu0 0
        %721 = vmatprep.subr.bf16.mxu0 0
        %722 = vmatpush1.bf16.xpose.msra.mxu0 0
        %723 = vmatprep.subr.bf16.mxu0 0
        %724 = vmatpush1.bf16.xpose.msra.mxu0 0
        %725 = vmatprep.subr.bf16.mxu0 0
        %726 = vmatpush1.bf16.xpose.msra.mxu0 0
        %727 = vmatprep.subr.bf16.mxu0 0
        %728 = vmatpush1.bf16.xpose.msra.mxu0 0
        %729 = vmatprep.subr.bf16.mxu0 0
        %730 = vmatpush1.bf16.xpose.msra.mxu0 0
        %731 = vmatprep.subr.bf16.mxu0 0
        %732 = vmatpush1.bf16.xpose.msra.mxu0 0
        %733 = vmatprep.subr.bf16.mxu0 0
        %734 = vmatpush1.bf16.xpose.msra.mxu0 0
        %735 = vmatprep.subr.bf16.mxu0 0
        %736 = vmatpush1.bf16.xpose.msra.mxu0 0
        %737 = vmatprep.subr.bf16.mxu0 0
        %738 = vmatpush1.bf16.xpose.msra.mxu0 0
        %739 = vmatprep.subr.bf16.mxu0 0
        %740 = vmatpush1.bf16.xpose.msra.mxu0 0
        %741 = vmatprep.subr.bf16.mxu0 0
        %742 = vmatpush1.bf16.xpose.msra.mxu0 0
        %743 = vmatprep.subr.bf16.mxu0 0
        %744 = vmatpush1.bf16.xpose.msra.mxu0 0
        %745 = vmatprep.subr.bf16.mxu0 0
        %746 = vmatpush1.bf16.xpose.msra.mxu0 0
        %747 = vmatprep.mubr.bf16.mxu0 0
        %748 = vmatmul.mubr.bf16.gmra.mrb[0].mxu0 %v710
        %v749 = vpop.f32.mrb[0].mxu0
        %v750 = vadd.f32 %v589, %v749
        %v751 = vpop.f32.mrb[0].mxu0
        %v752 = vpop.f32.mrb[0].mxu0
        %v753 = vpop.f32.mrb[0].mxu0
        %754 = vdwg.mxu0
        %v755 = vsel %vm591, %v750, -inf
        %756 = vmax.xlane.f32.xlu0 %v755
        %v757 = vpop.xlane.xlu0 %756
        %v758 = vsub.f32 %v750, %v757
        %v759 = vmul.f32 %v758, 1.442695
        %v760 = vpow.pop %v759
        %v761 = vsel %vm591, %v760, 0.0
        %762 = vadd.xlane.f32.xlu0 %v761
        %v763 = vpop.xlane.xlu0 %762
        %v764 = vrcp.pop %v763
        %v765 = vmul.f32 %v760, %v764
        %v766 = vpack.c.bf16 %v765, %v765
        %767 = vrot.lane.b32.xlu0 %v652, 88
        %v768 = vpop.permute.xlu0 %767
        %v770 = vsel %vm591, %v766, 0
        %v773 = vsel %vm658, %v768, 0
        %775 = vmatprep.subr.bf16.mxu0 0
        %776 = vmatpush1.bf16.msra.mxu0 %v773
        %777 = vmatprep.subr.bf16.mxu0 0
        %778 = vmatpush1.bf16.msra.mxu0 0
        %779 = vmatprep.subr.bf16.mxu0 0
        %780 = vmatpush1.bf16.msra.mxu0 0
        %781 = vmatprep.subr.bf16.mxu0 0
        %782 = vmatpush1.bf16.msra.mxu0 0
        %783 = vmatprep.subr.bf16.mxu0 0
        %784 = vmatpush1.bf16.msra.mxu0 0
        %785 = vmatprep.subr.bf16.mxu0 0
        %786 = vmatpush1.bf16.msra.mxu0 0
        %787 = vmatprep.subr.bf16.mxu0 0
        %788 = vmatpush1.bf16.msra.mxu0 0
        %789 = vmatprep.subr.bf16.mxu0 0
        %790 = vmatpush1.bf16.msra.mxu0 0
        %791 = vmatprep.subr.bf16.mxu0 0
        %792 = vmatpush1.bf16.msra.mxu0 0
        %793 = vmatprep.subr.bf16.mxu0 0
        %794 = vmatpush1.bf16.msra.mxu0 0
        %795 = vmatprep.subr.bf16.mxu0 0
        %796 = vmatpush1.bf16.msra.mxu0 0
        %797 = vmatprep.subr.bf16.mxu0 0
        %798 = vmatpush1.bf16.msra.mxu0 0
        %799 = vmatprep.subr.bf16.mxu0 0
        %800 = vmatpush1.bf16.msra.mxu0 0
        %801 = vmatprep.subr.bf16.mxu0 0
        %802 = vmatpush1.bf16.msra.mxu0 0
        %803 = vmatprep.subr.bf16.mxu0 0
        %804 = vmatpush1.bf16.msra.mxu0 0
        %805 = vmatprep.subr.bf16.mxu0 0
        %806 = vmatpush1.bf16.msra.mxu0 0
        %807 = vmatprep.mubr.bf16.mxu0 0
        %808 = vmatmul.mubr.bf16.gmra.mrb[0].mxu0 %v770
        %v809 = vpop.f32.mrb[0].mxu0
        %v810 = vadd.f32 0.0, %v809
        %v811 = vpop.f32.mrb[0].mxu0
        %v812 = vpop.f32.mrb[0].mxu0
        %v813 = vpop.f32.mrb[0].mxu0
        %814 = vdwg.mxu0
        %v815 = vpack.c.bf16 %v810, %v810
        %v816 = vld [vmem:[%s6 + $0x4] sm:$0xf]
        %v818 = vsel %vm591, %v815, 0
        %v821 = vsel %vm658, %v816, 0
        %823 = vmatprep.subr.bf16.mxu0 0
        %824 = vmatpush1.bf16.msra.mxu0 %v821
        %825 = vmatprep.subr.bf16.mxu0 0
        %826 = vmatpush1.bf16.msra.mxu0 0
        %827 = vmatprep.subr.bf16.mxu0 0
        %828 = vmatpush1.bf16.msra.mxu0 0
        %829 = vmatprep.subr.bf16.mxu0 0
        %830 = vmatpush1.bf16.msra.mxu0 0
        %831 = vmatprep.subr.bf16.mxu0 0
        %832 = vmatpush1.bf16.msra.mxu0 0
        %833 = vmatprep.subr.bf16.mxu0 0
        %834 = vmatpush1.bf16.msra.mxu0 0
        %835 = vmatprep.subr.bf16.mxu0 0
        %836 = vmatpush1.bf16.msra.mxu0 0
        %837 = vmatprep.subr.bf16.mxu0 0
        %838 = vmatpush1.bf16.msra.mxu0 0
        %839 = vmatprep.subr.bf16.mxu0 0
        %840 = vmatpush1.bf16.msra.mxu0 0
        %841 = vmatprep.subr.bf16.mxu0 0
        %842 = vmatpush1.bf16.msra.mxu0 0
        %843 = vmatprep.subr.bf16.mxu0 0
        %844 = vmatpush1.bf16.msra.mxu0 0
        %845 = vmatprep.subr.bf16.mxu0 0
        %846 = vmatpush1.bf16.msra.mxu0 0
        %847 = vmatprep.subr.bf16.mxu0 0
        %848 = vmatpush1.bf16.msra.mxu0 0
        %849 = vmatprep.subr.bf16.mxu0 0
        %850 = vmatpush1.bf16.msra.mxu0 0
        %851 = vmatprep.subr.bf16.mxu0 0
        %852 = vmatpush1.bf16.msra.mxu0 0
        %853 = vmatprep.subr.bf16.mxu0 0
        %854 = vmatpush1.bf16.msra.mxu0 0
        %855 = vmatprep.mubr.bf16.mxu0 0
        %856 = vmatmul.mubr.bf16.gmra.mrb[0].mxu0 %v818
        %v857 = vpop.f32.mrb[0].mxu0
        %v858 = vadd.f32 0.0, %v857
        %v859 = vpop.f32.mrb[0].mxu0
        %v860 = vpop.f32.mrb[0].mxu0
        %v861 = vpop.f32.mrb[0].mxu0
        %862 = vdwg.mxu0
        %v864 = vsel %vm591, %v702, 0
        %v867 = vsel %vm658, %v703, 0
        %869 = vmatprep.subr.bf16.mxu0 0
        %870 = vmatpush1.bf16.msra.mxu0 %v867
        %871 = vmatprep.subr.bf16.mxu0 0
        %872 = vmatpush1.bf16.msra.mxu0 0
        %873 = vmatprep.subr.bf16.mxu0 0
        %874 = vmatpush1.bf16.msra.mxu0 0
        %875 = vmatprep.subr.bf16.mxu0 0
        %876 = vmatpush1.bf16.msra.mxu0 0
        %877 = vmatprep.subr.bf16.mxu0 0
        %878 = vmatpush1.bf16.msra.mxu0 0
        %879 = vmatprep.subr.bf16.mxu0 0
        %880 = vmatpush1.bf16.msra.mxu0 0
        %881 = vmatprep.subr.bf16.mxu0 0
        %882 = vmatpush1.bf16.msra.mxu0 0
        %883 = vmatprep.subr.bf16.mxu0 0
        %884 = vmatpush1.bf16.msra.mxu0 0
        %885 = vmatprep.subr.bf16.mxu0 0
        %886 = vmatpush1.bf16.msra.mxu0 0
        %887 = vmatprep.subr.bf16.mxu0 0
        %888 = vmatpush1.bf16.msra.mxu0 0
        %889 = vmatprep.subr.bf16.mxu0 0
        %890 = vmatpush1.bf16.msra.mxu0 0
        %891 = vmatprep.subr.bf16.mxu0 0
        %892 = vmatpush1.bf16.msra.mxu0 0
        %893 = vmatprep.subr.bf16.mxu0 0
        %894 = vmatpush1.bf16.msra.mxu0 0
        %895 = vmatprep.subr.bf16.mxu0 0
        %896 = vmatpush1.bf16.msra.mxu0 0
        %897 = vmatprep.subr.bf16.mxu0 0
        %898 = vmatpush1.bf16.msra.mxu0 0
        %899 = vmatprep.subr.bf16.mxu0 0
        %900 = vmatpush1.bf16.msra.mxu0 0
        %901 = vmatprep.mubr.bf16.mxu0 0
        %902 = vmatmul.mubr.bf16.gmra.mrb[0].mxu0 %v864
        %v903 = vpop.f32.mrb[0].mxu0
        %v904 = vadd.f32 %v858, %v903
        %v905 = vpop.f32.mrb[0].mxu0
        %v906 = vpop.f32.mrb[0].mxu0
        %v907 = vpop.f32.mrb[0].mxu0
        %908 = vdwg.mxu0
        %909 = vrot.lane.b32.xlu0 %v582, 112
        %v910 = vpop.permute.xlu0 %909
        %911 = vrot.lane.b32.xlu0 %v652, 112
        %v912 = vpop.permute.xlu0 %911
        %v914 = vsel %vm591, %v910, 0
        %v917 = vsel %vm591, %v912, 0
        %919 = vmatprep.subr.bf16.mxu0 0
        %920 = vmatpush1.bf16.xpose.msra.mxu0 %v917
        %921 = vmatprep.subr.bf16.mxu0 0
        %922 = vmatpush1.bf16.xpose.msra.mxu0 0
        %923 = vmatprep.subr.bf16.mxu0 0
        %924 = vmatpush1.bf16.xpose.msra.mxu0 0
        %925 = vmatprep.subr.bf16.mxu0 0
        %926 = vmatpush1.bf16.xpose.msra.mxu0 0
        %927 = vmatprep.subr.bf16.mxu0 0
        %928 = vmatpush1.bf16.xpose.msra.mxu0 0
        %929 = vmatprep.subr.bf16.mxu0 0
        %930 = vmatpush1.bf16.xpose.msra.mxu0 0
        %931 = vmatprep.subr.bf16.mxu0 0
        %932 = vmatpush1.bf16.xpose.msra.mxu0 0
        %933 = vmatprep.subr.bf16.mxu0 0
        %934 = vmatpush1.bf16.xpose.msra.mxu0 0
        %935 = vmatprep.subr.bf16.mxu0 0
        %936 = vmatpush1.bf16.xpose.msra.mxu0 0
        %937 = vmatprep.subr.bf16.mxu0 0
        %938 = vmatpush1.bf16.xpose.msra.mxu0 0
        %939 = vmatprep.subr.bf16.mxu0 0
        %940 = vmatpush1.bf16.xpose.msra.mxu0 0
        %941 = vmatprep.subr.bf16.mxu0 0
        %942 = vmatpush1.bf16.xpose.msra.mxu0 0
        %943 = vmatprep.subr.bf16.mxu0 0
        %944 = vmatpush1.bf16.xpose.msra.mxu0 0
        %945 = vmatprep.subr.bf16.mxu0 0
        %946 = vmatpush1.bf16.xpose.msra.mxu0 0
        %947 = vmatprep.subr.bf16.mxu0 0
        %948 = vmatpush1.bf16.xpose.msra.mxu0 0
        %949 = vmatprep.subr.bf16.mxu0 0
        %950 = vmatpush1.bf16.xpose.msra.mxu0 0
        %951 = vmatprep.mubr.bf16.mxu0 0
        %952 = vmatmul.mubr.bf16.gmra.mrb[0].mxu0 %v914
        %v953 = vpop.f32.mrb[0].mxu0
        %v954 = vadd.f32 %v589, %v953
        %v955 = vpop.f32.mrb[0].mxu0
        %v956 = vpop.f32.mrb[0].mxu0
        %v957 = vpop.f32.mrb[0].mxu0
        %958 = vdwg.mxu0
        %v959 = vsel %vm591, %v954, -inf
        %960 = vmax.xlane.f32.xlu0 %v959
        %v961 = vpop.xlane.xlu0 %960
        %v962 = vsub.f32 %v954, %v961
        %v963 = vmul.f32 %v962, 1.442695
        %v964 = vpow.pop %v963
        %v965 = vsel %vm591, %v964, 0.0
        %966 = vadd.xlane.f32.xlu0 %v965
        %v967 = vpop.xlane.xlu0 %966
        %v968 = vrcp.pop %v967
        %v969 = vmul.f32 %v964, %v968
        %v970 = vpack.c.bf16 %v969, %v969
        %971 = vrot.lane.b32.xlu0 %v652, 80
        %v972 = vpop.permute.xlu0 %971
        %v974 = vsel %vm591, %v970, 0
        %v977 = vsel %vm658, %v972, 0
        %979 = vmatprep.subr.bf16.mxu0 0
        %980 = vmatpush1.bf16.msra.mxu0 %v977
        %981 = vmatprep.subr.bf16.mxu0 0
        %982 = vmatpush1.bf16.msra.mxu0 0
        %983 = vmatprep.subr.bf16.mxu0 0
        %984 = vmatpush1.bf16.msra.mxu0 0
        %985 = vmatprep.subr.bf16.mxu0 0
        %986 = vmatpush1.bf16.msra.mxu0 0
        %987 = vmatprep.subr.bf16.mxu0 0
        %988 = vmatpush1.bf16.msra.mxu0 0
        %989 = vmatprep.subr.bf16.mxu0 0
        %990 = vmatpush1.bf16.msra.mxu0 0
        %991 = vmatprep.subr.bf16.mxu0 0
        %992 = vmatpush1.bf16.msra.mxu0 0
        %993 = vmatprep.subr.bf16.mxu0 0
        %994 = vmatpush1.bf16.msra.mxu0 0
        %995 = vmatprep.subr.bf16.mxu0 0
        %996 = vmatpush1.bf16.msra.mxu0 0
        %997 = vmatprep.subr.bf16.mxu0 0
        %998 = vmatpush1.bf16.msra.mxu0 0
        %999 = vmatprep.subr.bf16.mxu0 0
        %1000 = vmatpush1.bf16.msra.mxu0 0
        %1001 = vmatprep.subr.bf16.mxu0 0
        %1002 = vmatpush1.bf16.msra.mxu0 0
        %1003 = vmatprep.subr.bf16.mxu0 0
        %1004 = vmatpush1.bf16.msra.mxu0 0
        %1005 = vmatprep.subr.bf16.mxu0 0
        %1006 = vmatpush1.bf16.msra.mxu0 0
        %1007 = vmatprep.subr.bf16.mxu0 0
        %1008 = vmatpush1.bf16.msra.mxu0 0
        %1009 = vmatprep.subr.bf16.mxu0 0
        %1010 = vmatpush1.bf16.msra.mxu0 0
        %1011 = vmatprep.mubr.bf16.mxu0 0
        %1012 = vmatmul.mubr.bf16.gmra.mrb[0].mxu0 %v974
        %v1013 = vpop.f32.mrb[0].mxu0
        %v1014 = vadd.f32 0.0, %v1013
        %v1015 = vpop.f32.mrb[0].mxu0
        %v1016 = vpop.f32.mrb[0].mxu0
        %v1017 = vpop.f32.mrb[0].mxu0
        %1018 = vdwg.mxu0
        %v1019 = vpack.c.bf16 %v1014, %v1014
        %v1020 = vld [vmem:[%s6 + $0x8] sm:$0xf]
        %v1022 = vsel %vm591, %v1019, 0
        %v1025 = vsel %vm658, %v1020, 0
        %1027 = vmatprep.subr.bf16.mxu0 0
        %1028 = vmatpush1.bf16.msra.mxu0 %v1025
        %1029 = vmatprep.subr.bf16.mxu0 0
        %1030 = vmatpush1.bf16.msra.mxu0 0
        %1031 = vmatprep.subr.bf16.mxu0 0
        %1032 = vmatpush1.bf16.msra.mxu0 0
        %1033 = vmatprep.subr.bf16.mxu0 0
        %1034 = vmatpush1.bf16.msra.mxu0 0
        %1035 = vmatprep.subr.bf16.mxu0 0
        %1036 = vmatpush1.bf16.msra.mxu0 0
        %1037 = vmatprep.subr.bf16.mxu0 0
        %1038 = vmatpush1.bf16.msra.mxu0 0
        %1039 = vmatprep.subr.bf16.mxu0 0
        %1040 = vmatpush1.bf16.msra.mxu0 0
        %1041 = vmatprep.subr.bf16.mxu0 0
        %1042 = vmatpush1.bf16.msra.mxu0 0
        %1043 = vmatprep.subr.bf16.mxu0 0
        %1044 = vmatpush1.bf16.msra.mxu0 0
        %1045 = vmatprep.subr.bf16.mxu0 0
        %1046 = vmatpush1.bf16.msra.mxu0 0
        %1047 = vmatprep.subr.bf16.mxu0 0
        %1048 = vmatpush1.bf16.msra.mxu0 0
        %1049 = vmatprep.subr.bf16.mxu0 0
        %1050 = vmatpush1.bf16.msra.mxu0 0
        %1051 = vmatprep.subr.bf16.mxu0 0
        %1052 = vmatpush1.bf16.msra.mxu0 0
        %1053 = vmatprep.subr.bf16.mxu0 0
        %1054 = vmatpush1.bf16.msra.mxu0 0
        %1055 = vmatprep.subr.bf16.mxu0 0
        %1056 = vmatpush1.bf16.msra.mxu0 0
        %1057 = vmatprep.subr.bf16.mxu0 0
        %1058 = vmatpush1.bf16.msra.mxu0 0
        %1059 = vmatprep.mubr.bf16.mxu0 0
        %1060 = vmatmul.mubr.bf16.gmra.mrb[0].mxu0 %v1022
        %v1061 = vpop.f32.mrb[0].mxu0
        %v1062 = vadd.f32 0.0, %v1061
        %v1063 = vpop.f32.mrb[0].mxu0
        %v1064 = vpop.f32.mrb[0].mxu0
        %v1065 = vpop.f32.mrb[0].mxu0
        %1066 = vdwg.mxu0
        %v1067 = vadd.f32 %v904, %v1062
        %1068 = vrot.lane.b32.xlu0 %v582, 104
        %v1069 = vpop.permute.xlu0 %1068
        %1070 = vrot.lane.b32.xlu0 %v652, 104
        %v1071 = vpop.permute.xlu0 %1070
        %v1073 = vsel %vm591, %v1069, 0
        %v1076 = vsel %vm591, %v1071, 0
        %1078 = vmatprep.subr.bf16.mxu0 0
        %1079 = vmatpush1.bf16.xpose.msra.mxu0 %v1076
        %1080 = vmatprep.subr.bf16.mxu0 0
        %1081 = vmatpush1.bf16.xpose.msra.mxu0 0
        %1082 = vmatprep.subr.bf16.mxu0 0
        %1083 = vmatpush1.bf16.xpose.msra.mxu0 0
        %1084 = vmatprep.subr.bf16.mxu0 0
        %1085 = vmatpush1.bf16.xpose.msra.mxu0 0
        %1086 = vmatprep.subr.bf16.mxu0 0
        %1087 = vmatpush1.bf16.xpose.msra.mxu0 0
        %1088 = vmatprep.subr.bf16.mxu0 0
        %1089 = vmatpush1.bf16.xpose.msra.mxu0 0
        %1090 = vmatprep.subr.bf16.mxu0 0
        %1091 = vmatpush1.bf16.xpose.msra.mxu0 0
        %1092 = vmatprep.subr.bf16.mxu0 0
        %1093 = vmatpush1.bf16.xpose.msra.mxu0 0
        %1094 = vmatprep.subr.bf16.mxu0 0
        %1095 = vmatpush1.bf16.xpose.msra.mxu0 0
        %1096 = vmatprep.subr.bf16.mxu0 0
        %1097 = vmatpush1.bf16.xpose.msra.mxu0 0
        %1098 = vmatprep.subr.bf16.mxu0 0
        %1099 = vmatpush1.bf16.xpose.msra.mxu0 0
        %1100 = vmatprep.subr.bf16.mxu0 0
        %1101 = vmatpush1.bf16.xpose.msra.mxu0 0
        %1102 = vmatprep.subr.bf16.mxu0 0
        %1103 = vmatpush1.bf16.xpose.msra.mxu0 0
        %1104 = vmatprep.subr.bf16.mxu0 0
        %1105 = vmatpush1.bf16.xpose.msra.mxu0 0
        %1106 = vmatprep.subr.bf16.mxu0 0
        %1107 = vmatpush1.bf16.xpose.msra.mxu0 0
        %1108 = vmatprep.subr.bf16.mxu0 0
        %1109 = vmatpush1.bf16.xpose.msra.mxu0 0
        %1110 = vmatprep.mubr.bf16.mxu0 0
        %1111 = vmatmul.mubr.bf16.gmra.mrb[0].mxu0 %v1073
        %v1112 = vpop.f32.mrb[0].mxu0
        %v1113 = vadd.f32 %v589, %v1112
        %v1114 = vpop.f32.mrb[0].mxu0
        %v1115 = vpop.f32.mrb[0].mxu0
        %v1116 = vpop.f32.mrb[0].mxu0
        %1117 = vdwg.mxu0
        %v1118 = vsel %vm591, %v1113, -inf
        %1119 = vmax.xlane.f32.xlu0 %v1118
        %v1120 = vpop.xlane.xlu0 %1119
        %v1121 = vsub.f32 %v1113, %v1120
        %v1122 = vmul.f32 %v1121, 1.442695
        %v1123 = vpow.pop %v1122
        %v1124 = vsel %vm591, %v1123, 0.0
        %1125 = vadd.xlane.f32.xlu0 %v1124
        %v1126 = vpop.xlane.xlu0 %1125
        %v1127 = vrcp.pop %v1126
        %v1128 = vmul.f32 %v1123, %v1127
        %v1129 = vpack.c.bf16 %v1128, %v1128
        %1130 = vrot.lane.b32.xlu0 %v652, 72
        %v1131 = vpop.permute.xlu0 %1130
        %v1133 = vsel %vm591, %v1129, 0
        %v1136 = vsel %vm658, %v1131, 0
        %1138 = vmatprep.subr.bf16.mxu0 0
        %1139 = vmatpush1.bf16.msra.mxu0 %v1136
        %1140 = vmatprep.subr.bf16.mxu0 0
        %1141 = vmatpush1.bf16.msra.mxu0 0
        %1142 = vmatprep.subr.bf16.mxu0 0
        %1143 = vmatpush1.bf16.msra.mxu0 0
        %1144 = vmatprep.subr.bf16.mxu0 0
        %1145 = vmatpush1.bf16.msra.mxu0 0
        %1146 = vmatprep.subr.bf16.mxu0 0
        %1147 = vmatpush1.bf16.msra.mxu0 0
        %1148 = vmatprep.subr.bf16.mxu0 0
        %1149 = vmatpush1.bf16.msra.mxu0 0
        %1150 = vmatprep.subr.bf16.mxu0 0
        %1151 = vmatpush1.bf16.msra.mxu0 0
        %1152 = vmatprep.subr.bf16.mxu0 0
        %1153 = vmatpush1.bf16.msra.mxu0 0
        %1154 = vmatprep.subr.bf16.mxu0 0
        %1155 = vmatpush1.bf16.msra.mxu0 0
        %1156 = vmatprep.subr.bf16.mxu0 0
        %1157 = vmatpush1.bf16.msra.mxu0 0
        %1158 = vmatprep.subr.bf16.mxu0 0
        %1159 = vmatpush1.bf16.msra.mxu0 0
        %1160 = vmatprep.subr.bf16.mxu0 0
        %1161 = vmatpush1.bf16.msra.mxu0 0
        %1162 = vmatprep.subr.bf16.mxu0 0
        %1163 = vmatpush1.bf16.msra.mxu0 0
        %1164 = vmatprep.subr.bf16.mxu0 0
        %1165 = vmatpush1.bf16.msra.mxu0 0
        %1166 = vmatprep.subr.bf16.mxu0 0
        %1167 = vmatpush1.bf16.msra.mxu0 0
        %1168 = vmatprep.subr.bf16.mxu0 0
        %1169 = vmatpush1.bf16.msra.mxu0 0
        %1170 = vmatprep.mubr.bf16.mxu0 0
        %1171 = vmatmul.mubr.bf16.gmra.mrb[0].mxu0 %v1133
        %v1172 = vpop.f32.mrb[0].mxu0
        %v1173 = vadd.f32 0.0, %v1172
        %v1174 = vpop.f32.mrb[0].mxu0
        %v1175 = vpop.f32.mrb[0].mxu0
        %v1176 = vpop.f32.mrb[0].mxu0
        %1177 = vdwg.mxu0
        %v1178 = vpack.c.bf16 %v1173, %v1173
        %v1179 = vld [vmem:[%s6 + $0xc] sm:$0xf]
        %v1181 = vsel %vm591, %v1178, 0
        %v1184 = vsel %vm658, %v1179, 0
        %1186 = vmatprep.subr.bf16.mxu0 0
        %1187 = vmatpush1.bf16.msra.mxu0 %v1184
        %1188 = vmatprep.subr.bf16.mxu0 0
        %1189 = vmatpush1.bf16.msra.mxu0 0
        %1190 = vmatprep.subr.bf16.mxu0 0
        %1191 = vmatpush1.bf16.msra.mxu0 0
        %1192 = vmatprep.subr.bf16.mxu0 0
        %1193 = vmatpush1.bf16.msra.mxu0 0
        %1194 = vmatprep.subr.bf16.mxu0 0
        %1195 = vmatpush1.bf16.msra.mxu0 0
        %1196 = vmatprep.subr.bf16.mxu0 0
        %1197 = vmatpush1.bf16.msra.mxu0 0
        %1198 = vmatprep.subr.bf16.mxu0 0
        %1199 = vmatpush1.bf16.msra.mxu0 0
        %1200 = vmatprep.subr.bf16.mxu0 0
        %1201 = vmatpush1.bf16.msra.mxu0 0
        %1202 = vmatprep.subr.bf16.mxu0 0
        %1203 = vmatpush1.bf16.msra.mxu0 0
        %1204 = vmatprep.subr.bf16.mxu0 0
        %1205 = vmatpush1.bf16.msra.mxu0 0
        %1206 = vmatprep.subr.bf16.mxu0 0
        %1207 = vmatpush1.bf16.msra.mxu0 0
        %1208 = vmatprep.subr.bf16.mxu0 0
        %1209 = vmatpush1.bf16.msra.mxu0 0
        %1210 = vmatprep.subr.bf16.mxu0 0
        %1211 = vmatpush1.bf16.msra.mxu0 0
        %1212 = vmatprep.subr.bf16.mxu0 0
        %1213 = vmatpush1.bf16.msra.mxu0 0
        %1214 = vmatprep.subr.bf16.mxu0 0
        %1215 = vmatpush1.bf16.msra.mxu0 0
        %1216 = vmatprep.subr.bf16.mxu0 0
        %1217 = vmatpush1.bf16.msra.mxu0 0
        %1218 = vmatprep.mubr.bf16.mxu0 0
        %1219 = vmatmul.mubr.bf16.gmra.mrb[0].mxu0 %v1181
        %v1220 = vpop.f32.mrb[0].mxu0
        %v1221 = vadd.f32 0.0, %v1220
        %v1222 = vpop.f32.mrb[0].mxu0
        %v1223 = vpop.f32.mrb[0].mxu0
        %v1224 = vpop.f32.mrb[0].mxu0
        %1225 = vdwg.mxu0
        %v1226 = vadd.f32 %v1067, %v1221
        %v1227 = vadd.f32 %v514, %v1226
        %v1228 = vld [vmem:[%s7] sm:$0x1]
        %v1230 = vlaneseq
        %v1231 = vshrl.u32 %v1230, 7
        %v1232 = vsub.s32 0, %v1231
        %v1233 = vrot.slane %v1228, %v1232
        %v1235 = vadd.f32 %v1227, %v1233
        %v1236 = vsel %vm538, %v1235, 0.0
        %1237 = vadd.xlane.f32.xlu0 %v1236
        %v1238 = vpop.xlane.xlu0 %1237
        %v1239 = vrcp.pop 32.0
        %v1240 = vmul.f32 %v1238, %v1239
        %v1241 = vsub.f32 %v1235, %v1240
        %v1242 = vmul.f32 %v1241, %v1241
        %v1243 = vsel %vm538, %v1242, 0.0
        %1244 = vadd.xlane.f32.xlu0 %v1243
        %v1245 = vpop.xlane.xlu0 %1244
        %v1246 = vmul.f32 %v1245, %v1239
        %v1247 = vadd.f32 %v1246, 1e-05
        %v1248 = vrsqrt.pop %v1247
        %v1249 = vmul.f32 %v1241, %v1248
        %v1250 = vld [vmem:[%s8] sm:$0x1]
        %v1252 = vlaneseq
        %v1253 = vshrl.u32 %v1252, 7
        %v1254 = vsub.s32 0, %v1253
        %v1255 = vrot.slane %v1250, %v1254
        %v1257 = vmul.f32 %v1249, %v1255
        %v1258 = vld [vmem:[%s9] sm:$0x1]
        %v1260 = vlaneseq
        %v1261 = vshrl.u32 %v1260, 7
        %v1262 = vsub.s32 0, %v1261
        %v1263 = vrot.slane %v1258, %v1262
        %v1265 = vadd.f32 %v1257, %v1263
        %v1266 = vpack.c.bf16 %v1265, %v1265
        %vm1267 = vcmask 257024
        %1268 = vst.msk [vmem:[%s428] sm:$0xf] %vm1267, %v1266
        %s1269 = sand.u32 %s270, 1
        %s1270 = scalar_lea.sflag [#allocation5], %s1269
        %s1271 = sand.u32 %s270, 1
        %s1272 = smul.addr %s1271, 4
        %s1273 = scalar_lea.vmem [#allocation9], %s1272
        // Predicated region
        $region77: #{tpu_custom_call.1} parent=59 // pred_check
          %p1274 = pneg %p280
        $region78: #{tpu_custom_call.1} parent=59 // pred_check_branch
          %1276 = sbr.rel (%p1274) target = $region80
        $region79: #{tpu_custom_call.1} parent=59 // pred_region
          %s1278 = ssub.s32 64, 64
          %1279 = vsyncadd %s1270, %s1278
          %s1280 = sadd.s32 %s33, %s32
          %s1281 = smul.addr %s1280, 64
          %s1282 = scalar_lea.hbm %s10, %s1281
          %s1284 = sshll.u32 %s1273, 4
          %s1285 = int_to_ptr.vmem [resolvable:$true] %s1284
          %1287 = dma.vmem_to_hbm [thread:$0]  %s1285, 64, %s1282, %s1270
        $region80: #{tpu_custom_call.1} parent=59 // pred_fallthru
          _
      $region60: #{tpu_custom_call.1} parent=5 // pred_fallthru
        _
      %p1288 = scmp.le.s32.totalorder 2, %s23
      // Predicated region
      $region81: #{tpu_custom_call.1} parent=5 // pred_check
        %p1289 = pneg %p1288
      $region82: #{tpu_custom_call.1} parent=5 // pred_check_branch
        %1291 = sbr.rel (%p1289) target = $region84
      $region83: #{tpu_custom_call.1} parent=5 // pred_region
        %s1292 = ssub.s32 %s23, 2
        // Predicated region
        $region85: #{tpu_custom_call.1} parent=83 // pred_check
          %p1293 = pneg %p286
        $region86: #{tpu_custom_call.1} parent=83 // pred_check_branch
          %1295 = sbr.rel (%p1293) target = $region88
        $region87: #{tpu_custom_call.1} parent=83 // pred_region
          %s1296 = sand.u32 %s271, 1
          %s1297 = scalar_lea.sflag [#allocation5], %s1296
          %s1298 = sand.u32 %s271, 1
          %s1299 = smul.addr %s1298, 4
          %s1300 = scalar_lea.vmem [#allocation9], %s1299
          %1301 = dma.done %s1297, 64
        $region88: #{tpu_custom_call.1} parent=83 // pred_fallthru
          _
      $region84: #{tpu_custom_call.1} parent=5 // pred_fallthru
        _
    $region6: #{tpu_custom_call.1} parent=1 // loop_footer
      %s27 = sadd.s32 1, %s23
    $region7: #{tpu_custom_call.1} parent=1 // loop_footer_branch
      %22 = sbr.rel target = $region3
    $region8: #{tpu_custom_call.1} parent=1 // loop_exit
      _
    %1302 = vsyncpa [#allocation4], 1
    %s1303 = scalar_lea.sflag [#allocation4], 1
    %1304 = vsyncpa %s1303, 1
    %1305 = vsyncpa [#allocation7], 1
    %1306 = vsyncpa [#allocation5], 1
    %s1307 = scalar_lea.sflag [#allocation5], 1
    %1308 = vsyncpa %s1307, 1

</llo_original>
